<compile_context>
chip_gen: v6e
topology: v6e:2x2x1
jax: 0.10.0
libtpu: 0.0.40
codegen_flags: <defaults>
</compile_context>

<pallas_src>
import functools
import math

import jax
import jax.numpy as jnp
import numpy as np
from jax import lax
from jax.experimental import pallas as pl
from jax.experimental.pallas import tpu as pltpu

NEG_INF = -1e30   # additive causal-mask bias; scores stay f32 (never bf16)


# ----------------------------------------------------------------------------
# in-kernel helpers
# ----------------------------------------------------------------------------
def _layernorm(x, w, b, eps=1e-5):
    mu = jnp.mean(x, axis=-1, keepdims=True)
    var = jnp.mean((x - mu) ** 2, axis=-1, keepdims=True)
    return (x - mu) * lax.rsqrt(var + eps) * w + b


def _roll_left_cols(x, p, size):
    """Left-roll the columns of (rows, size) `x` by the static amount `p`."""
    if p % size == 0:
        return x
    if size % 128 == 0:
        # vreg-aligned lane dim: single XLU lane rotation (vector-extended slot).
        return pltpu.roll(x, size - p, axis=1)
    # lane dim < 128 / unaligned (small test config): slice+concat always lowers.
    return jnp.concatenate([x[:, p:], x[:, :p]], axis=1)


# ----------------------------------------------------------------------------
# fused kernel: stack-embed + L transformer layers + stack-head
#   grid = (num_batch_blocks,);  all weights are VMEM-resident constants.
# ----------------------------------------------------------------------------
def fused_kernel(
    # inputs
    u_ref,                                  # (1, bblk*S, E)  bf16 pre-interleaved embed input
    wemb_ref,                               # (E, H)          bf16 fused embed weights+biases
    ln1w_ref, ln1b_ref,                     # (L, 1, H)       f32
    wqkv_ref, bqkv_ref,                     # (L, H, 3H) bf16 / (L, 1, 3H) f32 (1/sqrt(hd) folded into Q)
    er_ref,                                 # (L, S, hd)      bf16 relative position embeddings
    wo_ref, bo_ref,                         # (L, H, H) bf16 / (L, 1, H) f32
    ln2w_ref, ln2b_ref,                     # (L, 1, H)       f32
    w1_ref, b1_ref,                         # (L, H, F) bf16 / (L, 1, F) f32
    w2_ref, b2_ref,                         # (L, F, H) bf16 / (L, 1, H) f32
    wh_ref, bh_ref,                         # (H, Opad) bf16 / (1, Opad) f32 fused, lane-padded head
    # outputs
    out_ref,                                # (1, bblk*S, Opad) f32
    # statics
    *, bblk, seq, num_heads,
):
    f32, bf16 = jnp.float32, jnp.bfloat16
    S, nh = seq, num_heads
    L = ln1w_ref.shape[0]
    H = wemb_ref.shape[1]
    hd = er_ref.shape[2]
    nt = (((1,), (1,)), ((), ()))           # contract last dims: q @ k^T style

    # ---- O(S^2) helpers generated in-kernel (no HBM constants to DMA) ----
    rows = lax.broadcasted_iota(jnp.int32, (S, S), 0)
    cols = lax.broadcasted_iota(jnp.int32, (S, S), 1)
    causal_bias = jnp.where(cols <= rows, jnp.float32(0.0), jnp.float32(NEG_INF))
    shifts = (S - 1) - rows                 # per-row left-roll amount of the skew
    nbits = max(1, int(S - 1).bit_length())
    bit_masks = [((shifts >> b) & 1) == 1 for b in range(nbits)]

    # ----------------------- stack embedder: one matmul ----------------------
    x = jnp.dot(u_ref[0], wemb_ref[...], preferred_element_type=f32)   # (bblk*S, H)

    # --------------------------- transformer layers --------------------------
    def layer_body(l, x):
        # --- relative multi-head self-attention (pre-LN) ---
        h = _layernorm(x, ln1w_ref[l], ln1b_ref[l])
        qkv = jnp.dot(h.astype(bf16), wqkv_ref[l],
                      preferred_element_type=f32) + bqkv_ref[l]        # (bblk*S, 3H)
        er_b = er_ref[l]                                               # (S, hd)

        blocks = []
        for bi in range(bblk):                 # static: batch elements in the block
            r0 = bi * S
            head_outs = []
            for n in range(nh):                # static: attention heads
                lo = n * hd
                qh = qkv[r0:r0 + S, lo:lo + hd].astype(bf16)
                kh = qkv[r0:r0 + S, H + lo:H + lo + hd].astype(bf16)
                vh = qkv[r0:r0 + S, 2 * H + lo:2 * H + lo + hd].astype(bf16)

                sc = lax.dot_general(qh, kh, nt, preferred_element_type=f32)     # (S, S)
                qer = lax.dot_general(qh, er_b, nt, preferred_element_type=f32)  # (S, S)
                # music-transformer skew: row i left-rolled by (S-1-i), built
                # from log2(S) power-of-two rolls gated by iota-derived masks.
                for b in range(nbits):
                    rolled = _roll_left_cols(qer, 1 << b, S)
                    qer = jnp.where(bit_masks[b], rolled, qer)

                scores = sc + qer + causal_bias        # mask added last, all f32
                m = jnp.max(scores, axis=-1, keepdims=True)
                e = jnp.exp(scores - m)
                att = e * pl.reciprocal(jnp.sum(e, axis=-1, keepdims=True),
                                        approx=True)
                head_outs.append(jnp.dot(att.astype(bf16), vh,
                                         preferred_element_type=f32))
            blocks.append(jnp.concatenate(head_outs, axis=1))          # (S, H)
        attn = blocks[0] if bblk == 1 else jnp.concatenate(blocks, axis=0)
        x = x + jnp.dot(attn.astype(bf16), wo_ref[l],
                        preferred_element_type=f32) + bo_ref[l]

        # --- MLP ---
        h2 = _layernorm(x, ln2w_ref[l], ln2b_ref[l])
        g = jnp.dot(h2.astype(bf16), w1_ref[l], preferred_element_type=f32) + b1_ref[l]
        # TODO(synk): torch nn.GELU default is exact erf; tanh approximation used.
        g = jax.nn.gelu(g, approximate=True)
        x = x + jnp.dot(g.astype(bf16), w2_ref[l], preferred_element_type=f32) + b2_ref[l]
        return x

    x = lax.fori_loop(0, L, layer_body, x)

    # ------------------------------- stack head ------------------------------
    # Project every token with a lane-dense (128-padded) fused [z | r | d] head;
    # the "last token of each (z,a,r) triple" selection is a slice in the glue.
    # TODO(synk): no final LayerNorm before the head (GPT source not provided).
    out_ref[0] = jnp.dot(x.astype(bf16), wh_ref[...],
                         preferred_element_type=f32) + bh_ref[...]


# ----------------------------------------------------------------------------
# JAX-side preparation
# ----------------------------------------------------------------------------
def _build_embed_input(z, a, r):
    """Pre-compose the stack-embedder interleave into ONE kernel input.

    Token order is (z_t, a_t, r_t); the last three columns are one-hot stream
    indicators so the three embed biases fold into the fused embed weights
    (removes the old (S,S) permutation matmul + constant entirely).
    """
    B, T, zdim = z.shape
    A = a.shape[2]
    z32, a32, r32 = z.astype(jnp.float32), a.astype(jnp.float32), r.astype(jnp.float32)
    zeros = lambda n: jnp.zeros((B, T, n), jnp.float32)
    ones = jnp.ones((B, T, 1), jnp.float32)
    zrow = jnp.concatenate([z32, zeros(A + 1), ones, zeros(2)], axis=-1)
    arow = jnp.concatenate([zeros(zdim), a32, zeros(2), ones, zeros(1)], axis=-1)
    rrow = jnp.concatenate([zeros(zdim + A), r32, zeros(2), ones], axis=-1)
    u = jnp.stack([zrow, arow, rrow], axis=2).reshape(B, 3 * T, zdim + A + 4)
    return u.astype(jnp.bfloat16)


def _prepare(params, cfg, out_pad):
    H = cfg['hdn_dim']
    nh = cfg['num_heads']
    hd = H // nh
    scale = 1.0 / math.sqrt(hd)
    bf16 = jnp.bfloat16

    emb, head, layers = params['embedder'], params['head'], params['layers']

    # fused embed weight: [wz; wa; wr; bz; ba; br]
    w_emb = jnp.concatenate([emb['wz'], emb['wa'], emb['wr'],
                             emb['bz'], emb['ba'], emb['br']], axis=0).astype(bf16)

    def stack(name):
        return jnp.stack([lp[name] for lp in layers], axis=0)

    # fold 1/sqrt(hd) into the Q projection (scales content & relative scores)
    wqkv, bqkv = stack('wqkv'), stack('bqkv')
    qscale = jnp.concatenate([jnp.full((H,), scale, jnp.float32),
                              jnp.ones((2 * H,), jnp.float32)], axis=0)
    wqkv = (wqkv * qscale).astype(bf16)
    bqkv = bqkv * qscale

    # fused + lane-padded head: [z logits | reward | done | 0-pad]
    wh = jnp.concatenate([head['wz'], head['wr'], head['wd']], axis=1)
    bh = jnp.concatenate([head['bz'], head['br'], head['bd']], axis=1)
    out_dim = wh.shape[1]
    wh = jnp.pad(wh, ((0, 0), (0, out_pad - out_dim))).astype(bf16)
    bh = jnp.pad(bh, ((0, 0), (0, out_pad - out_dim)))

    return [
        w_emb,
        stack('ln1w'), stack('ln1b'),
        wqkv, bqkv,
        stack('er').astype(bf16),
        stack('wo').astype(bf16), stack('bo'),
        stack('ln2w'), stack('ln2b'),
        stack('w1').astype(bf16), stack('b1'),
        stack('w2').astype(bf16), stack('b2'),
        wh, bh,
    ]


def _pick_batch_block(B, S, H):
    """VMEM-bounded batch block; keep >= 2 parallel grid steps when B >= 2 so
    both v7x TensorCores get work."""
    per_elem = S * 12 * H * 4          # rough peak f32 activation bytes / batch element
    cap = max(1, (8 << 20) // max(per_elem, 1))
    best = 1
    for cand in range(1, B + 1):
        if B % cand or cand > cap:
            continue
        if B >= 2 and B // cand < 2:
            continue
        best = cand
    return best


# ----------------------------------------------------------------------------
# full forward pass
# ----------------------------------------------------------------------------
def pytfex_transformer_forward(params, z, a, r, cfg, *, bblk=None):
    B, T, zdim = z.shape
    A = a.shape[2]
    H = cfg['hdn_dim']
    S = 3 * T
    E = zdim + A + 4
    out_dim = zdim + 2
    out_pad = ((out_dim + 127) // 128) * 128

    if bblk is None:
        bblk = _pick_batch_block(B, S, H)
    assert B % bblk == 0
    nB = B // bblk

    args = _prepare(params, cfg, out_pad)
    u = _build_embed_input(z, a, r).reshape(nB, bblk * S, E)

    # scoped-VMEM budget: resident weights (double-buffered BlockSpecs) plus
    # streamed in/out blocks, capped by the chip's physical VMEM (v7x: 64 MiB).
    const_bytes = sum(int(x.size) * x.dtype.itemsize for x in args)
    block_bytes = bblk * S * (E * 2 + out_pad * 4)
    needed = 2 * (const_bytes + block_bytes) + (8 << 20)
    try:
        cap = int(0.85 * pltpu.get_tpu_info().vmem_capacity_bytes)
    except Exception:
        cap = 56 << 20
    vmem_limit = int(min(cap, max(32 << 20, needed)))

    kernel = functools.partial(fused_kernel, bblk=bblk, seq=S,
                               num_heads=cfg['num_heads'])

    def const_spec(arr):
        nd = arr.ndim
        return pl.BlockSpec(arr.shape, lambda i, _n=nd: (0,) * _n)

    in_specs = [pl.BlockSpec((1, bblk * S, E), lambda i: (i, 0, 0))]
    in_specs += [const_spec(x) for x in args]

    out = pl.pallas_call(
        kernel,
        out_shape=jax.ShapeDtypeStruct((nB, bblk * S, out_pad), jnp.float32),
        grid=(nB,),
        in_specs=in_specs,
        out_specs=pl.BlockSpec((1, bblk * S, out_pad), lambda i: (i, 0, 0)),
        compiler_params=pltpu.CompilerParams(
            dimension_semantics=("parallel",),
            vmem_limit_bytes=vmem_limit,
        ),
    )(u, *args)

    # last token of each (z_t, a_t, r_t) triple; drop the lane padding.
    # TODO(synk): the 3t+2 token-selection offset is an assumption (StackHead
    #             source not provided).
    out = out.reshape(B, S, out_pad)[:, 2::3, :out_dim]
    z_logits = out[..., :zdim].reshape(B, T, cfg['latent_dim'], cfg['num_cat'])
    r_pred = out[..., zdim:zdim + 1]
    d_pred = out[..., zdim + 1:zdim + 2]
    # TODO(synk): the torch model wraps z_logits in a Distribution; raw
    #             categorical logits are returned here instead.
    return z_logits, r_pred, d_pred


# ----------------------------------------------------------------------------
# deterministic parameter construction (fused QKV / fused head layout)
# ----------------------------------------------------------------------------
def init_params(key, cfg):
    H = cfg['hdn_dim']
    nh = cfg['num_heads']
    hd = H // nh
    T = cfg['num_ts']
    S = 3 * T
    zdim = cfg['latent_dim'] * cfg['num_cat']
    A = cfg['action_size']
    F = 4 * H
    keys = iter(jax.random.split(key, 1024))

    def w(shape, scale):
        return jax.random.normal(next(keys), shape, jnp.float32) * scale

    params = {}
    params['embedder'] = dict(
        wz=w((zdim, H), 1.0 / math.sqrt(zdim)), bz=w((1, H), 0.01),
        wa=w((A, H), 1.0 / math.sqrt(A)),       ba=w((1, H), 0.01),
        wr=w((1, H), 1.0),                      br=w((1, H), 0.01))

    layers = []
    for _ in range(cfg['num_layers']):
        layers.append(dict(
            ln1w=jnp.ones((1, H), jnp.float32), ln1b=jnp.zeros((1, H), jnp.float32),
            wqkv=w((H, 3 * H), 1.0 / math.sqrt(H)), bqkv=w((1, 3 * H), 0.01),
            er=w((S, hd), 0.02),
            wo=w((H, H), 1.0 / math.sqrt(H)), bo=w((1, H), 0.01),
            ln2w=jnp.ones((1, H), jnp.float32), ln2b=jnp.zeros((1, H), jnp.float32),
            w1=w((H, F), 1.0 / math.sqrt(H)), b1=w((1, F), 0.01),
            w2=w((F, H), 1.0 / math.sqrt(F)), b2=w((1, H), 0.01)))
    params['layers'] = layers

    params['head'] = dict(
        wz=w((H, zdim), 1.0 / math.sqrt(H)), bz=w((1, zdim), 0.01),
        wr=w((H, 1), 1.0 / math.sqrt(H)),    br=w((1, 1), 0.01),
        wd=w((H, 1), 1.0 / math.sqrt(H)),    bd=w((1, 1), 0.01))
    return params


# ----------------------------------------------------------------------------
# pure-JAX reference (bf16-matched math) used for the in-script parity check
# ----------------------------------------------------------------------------
def reference_forward(params, z, a, r, cfg):
    f32, bf16 = jnp.float32, jnp.bfloat16
    B, T, zdim = z.shape
    H = cfg['hdn_dim']
    nh = cfg['num_heads']
    hd = H // nh
    S = 3 * T
    scale = 1.0 / math.sqrt(hd)
    emb, head = params['embedder'], params['head']

    def mm(x, w):
        return jnp.dot(x.astype(bf16), w.astype(bf16), preferred_element_type=f32)

    def ln(x, w, b):
        mu = x.mean(-1, keepdims=True)
        var = ((x - mu) ** 2).mean(-1, keepdims=True)
        return (x - mu) / jnp.sqrt(var + 1e-5) * w + b

    ez = mm(z, emb['wz']) + emb['bz']
    ea = mm(a, emb['wa']) + emb['ba']
    eo = (r.astype(bf16).astype(f32) * emb['wr'].astype(bf16).astype(f32)) + emb['br']
    x = jnp.stack([ez, ea, eo], axis=2).reshape(B, S, H)

    i = jnp.arange(S)[:, None]
    j = jnp.arange(S)[None, :]
    causal = jnp.where(j <= i, 0.0, NEG_INF).astype(f32)
    src = (j + (S - 1) - i) % S                              # skew gather indices

    for lp in params['layers']:
        h = ln(x, lp['ln1w'], lp['ln1b'])
        qkv = mm(h, lp['wqkv']) + lp['bqkv']
        q, k, v = jnp.split(qkv, 3, axis=-1)
        heads = lambda t: t.reshape(B, S, nh, hd).transpose(0, 2, 1, 3)
        q, k, v = heads(q), heads(k), heads(v)
        sc = jnp.einsum('bhqd,bhkd->bhqk', q.astype(bf16), k.astype(bf16),
                        preferred_element_type=f32)
        qer = jnp.einsum('bhqd,pd->bhqp', q.astype(bf16), lp['er'].astype(bf16),
                         preferred_element_type=f32)
        srel = jnp.take_along_axis(qer, jnp.broadcast_to(src, qer.shape), axis=-1)
        scores = (sc + srel) * scale + causal
        att = jax.nn.softmax(scores, axis=-1)
        o = jnp.einsum('bhqk,bhkd->bhqd', att.astype(bf16), v.astype(bf16),
                       preferred_element_type=f32)
        o = o.transpose(0, 2, 1, 3).reshape(B, S, H)
        x = x + mm(o, lp['wo']) + lp['bo']
        h2 = ln(x, lp['ln2w'], lp['ln2b'])
        g = jax.nn.gelu(mm(h2, lp['w1']) + lp['b1'], approximate=True)
        x = x + mm(g, lp['w2']) + lp['b2']

    xs = x[:, 2::3]
    zl = mm(xs, head['wz']) + head['bz']
    rp = mm(xs, head['wr']) + head['br']
    dp = mm(xs, head['wd']) + head['bd']
    return zl.reshape(B, T, cfg['latent_dim'], cfg['num_cat']), rp, dp


# ----------------------------------------------------------------------------
if __name__ == "__main__":
    cfg = dict(num_ts=4, num_cat=8, latent_dim=4, action_size=6,
               num_heads=4, hdn_dim=32, num_layers=2)

    key = jax.random.PRNGKey(0)
    kp, kz, ka, kr = jax.random.split(key, 4)
    params = init_params(kp, cfg)

    B, T = 2, cfg['num_ts']
    zdim = cfg['num_cat'] * cfg['latent_dim']
    z = jax.random.normal(kz, (B, T, zdim), jnp.float32)
    a = jax.random.normal(ka, (B, T, cfg['action_size']), jnp.float32)
    r = jax.random.normal(kr, (B, T, 1), jnp.float32)

    fwd = jax.jit(lambda p_, z_, a_, r_: pytfex_transformer_forward(p_, z_, a_, r_, cfg))
    z_logits, r_pred, d_pred = fwd(params, z, a, r)
    jax.block_until_ready((z_logits, r_pred, d_pred))

    assert z_logits.shape == (B, T, cfg['latent_dim'], cfg['num_cat'])
    assert r_pred.shape == (B, T, 1) and d_pred.shape == (B, T, 1)
    assert bool(jnp.all(jnp.isfinite(z_logits)))
    assert bool(jnp.all(jnp.isfinite(r_pred)))
    assert bool(jnp.all(jnp.isfinite(d_pred)))

    # pure-JAX reference parity check (loose tol absorbs approx-reciprocal
    # softmax and accumulation-order differences)
    zl_ref, r_ref, d_ref = jax.jit(
        lambda p_, z_, a_, r_: reference_forward(p_, z_, a_, r_, cfg))(params, z, a, r)
    np.testing.assert_allclose(np.asarray(z_logits), np.asarray(zl_ref), rtol=5e-2, atol=5e-2)
    np.testing.assert_allclose(np.asarray(r_pred), np.asarray(r_ref), rtol=5e-2, atol=5e-2)
    np.testing.assert_allclose(np.asarray(d_pred), np.asarray(d_ref), rtol=5e-2, atol=5e-2)

    print("KERNEL_OK")
</pallas_src>

<mosaic_0001>
module attributes {stable_mosaic.version = 11 : i64} {
  func.func @fused_kernel(%arg0: i32, %arg1: memref<1x12x42xbf16, #tpu.memory_space<vmem>>, %arg2: memref<42x32xbf16, #tpu.memory_space<vmem>>, %arg3: memref<2x1x32xf32, #tpu.memory_space<vmem>>, %arg4: memref<2x1x32xf32, #tpu.memory_space<vmem>>, %arg5: memref<2x32x96xbf16, #tpu.memory_space<vmem>>, %arg6: memref<2x1x96xf32, #tpu.memory_space<vmem>>, %arg7: memref<2x12x8xbf16, #tpu.memory_space<vmem>>, %arg8: memref<2x32x32xbf16, #tpu.memory_space<vmem>>, %arg9: memref<2x1x32xf32, #tpu.memory_space<vmem>>, %arg10: memref<2x1x32xf32, #tpu.memory_space<vmem>>, %arg11: memref<2x1x32xf32, #tpu.memory_space<vmem>>, %arg12: memref<2x32x128xbf16, #tpu.memory_space<vmem>>, %arg13: memref<2x1x128xf32, #tpu.memory_space<vmem>>, %arg14: memref<2x128x32xbf16, #tpu.memory_space<vmem>>, %arg15: memref<2x1x32xf32, #tpu.memory_space<vmem>>, %arg16: memref<32x128xbf16, #tpu.memory_space<vmem>>, %arg17: memref<1x128xf32, #tpu.memory_space<vmem>>, %arg18: memref<1x12x128xf32, #tpu.memory_space<vmem>>) attributes {dimension_semantics = [#tpu.dimension_semantics<parallel>], iteration_bounds = array<i64: 2>, scalar_prefetch = 0 : i64, scratch_operands = 0 : i64, tpu.core_type = #tpu.core_type<tc>, window_params = [{transform_indices = @transform_0, window_bounds = array<i64: 1, 12, 42>}, {pipeline_mode = #tpu.pipeline_mode<synchronous>, transform_indices = @transform_1, window_bounds = array<i64: 42, 32>}, {pipeline_mode = #tpu.pipeline_mode<synchronous>, transform_indices = @transform_2, window_bounds = array<i64: 2, 1, 32>}, {pipeline_mode = #tpu.pipeline_mode<synchronous>, transform_indices = @transform_3, window_bounds = array<i64: 2, 1, 32>}, {pipeline_mode = #tpu.pipeline_mode<synchronous>, transform_indices = @transform_4, window_bounds = array<i64: 2, 32, 96>}, {pipeline_mode = #tpu.pipeline_mode<synchronous>, transform_indices = @transform_5, window_bounds = array<i64: 2, 1, 96>}, {pipeline_mode = #tpu.pipeline_mode<synchronous>, transform_indices = @transform_6, window_bounds = array<i64: 2, 12, 8>}, {pipeline_mode = #tpu.pipeline_mode<synchronous>, transform_indices = @transform_7, window_bounds = array<i64: 2, 32, 32>}, {pipeline_mode = #tpu.pipeline_mode<synchronous>, transform_indices = @transform_8, window_bounds = array<i64: 2, 1, 32>}, {pipeline_mode = #tpu.pipeline_mode<synchronous>, transform_indices = @transform_9, window_bounds = array<i64: 2, 1, 32>}, {pipeline_mode = #tpu.pipeline_mode<synchronous>, transform_indices = @transform_10, window_bounds = array<i64: 2, 1, 32>}, {pipeline_mode = #tpu.pipeline_mode<synchronous>, transform_indices = @transform_11, window_bounds = array<i64: 2, 32, 128>}, {pipeline_mode = #tpu.pipeline_mode<synchronous>, transform_indices = @transform_12, window_bounds = array<i64: 2, 1, 128>}, {pipeline_mode = #tpu.pipeline_mode<synchronous>, transform_indices = @transform_13, window_bounds = array<i64: 2, 128, 32>}, {pipeline_mode = #tpu.pipeline_mode<synchronous>, transform_indices = @transform_14, window_bounds = array<i64: 2, 1, 32>}, {pipeline_mode = #tpu.pipeline_mode<synchronous>, transform_indices = @transform_15, window_bounds = array<i64: 32, 128>}, {pipeline_mode = #tpu.pipeline_mode<synchronous>, transform_indices = @transform_16, window_bounds = array<i64: 1, 128>}, {transform_indices = @transform_17, window_bounds = array<i64: 1, 12, 128>}]} {
    %0 = tpu.iota {dimensions = array<i32: 0>} : vector<12x12xi32>
    %1 = tpu.iota {dimensions = array<i32: 1>} : vector<12x12xi32>
    %2 = arith.cmpi sle, %1, %0 : vector<12x12xi32>
    %cst = arith.constant 0.000000e+00 : f32
    %cst_0 = arith.constant -1.000000e+30 : f32
    %3 = vector.broadcast %cst : f32 to vector<12x12xf32>
    %4 = vector.broadcast %cst_0 : f32 to vector<12x12xf32>
    %5 = arith.select %2, %3, %4 : vector<12x12xi1>, vector<12x12xf32>
    %c11_i32 = arith.constant 11 : i32
    %6 = vector.broadcast %c11_i32 : i32 to vector<12x12xi32>
    %7 = arith.subi %6, %0 : vector<12x12xi32>
    %c0_i32 = arith.constant 0 : i32
    %8 = vector.broadcast %c0_i32 : i32 to vector<12x12xi32>
    %9 = arith.shrsi %7, %8 : vector<12x12xi32>
    %c1_i32 = arith.constant 1 : i32
    %10 = vector.broadcast %c1_i32 : i32 to vector<12x12xi32>
    %11 = arith.andi %9, %10 : vector<12x12xi32>
    %c1_i32_1 = arith.constant 1 : i32
    %12 = vector.broadcast %c1_i32_1 : i32 to vector<12x12xi32>
    %13 = arith.cmpi eq, %11, %12 : vector<12x12xi32>
    %c1_i32_2 = arith.constant 1 : i32
    %14 = vector.broadcast %c1_i32_2 : i32 to vector<12x12xi32>
    %15 = arith.shrsi %7, %14 : vector<12x12xi32>
    %c1_i32_3 = arith.constant 1 : i32
    %16 = vector.broadcast %c1_i32_3 : i32 to vector<12x12xi32>
    %17 = arith.andi %15, %16 : vector<12x12xi32>
    %c1_i32_4 = arith.constant 1 : i32
    %18 = vector.broadcast %c1_i32_4 : i32 to vector<12x12xi32>
    %19 = arith.cmpi eq, %17, %18 : vector<12x12xi32>
    %c2_i32 = arith.constant 2 : i32
    %20 = vector.broadcast %c2_i32 : i32 to vector<12x12xi32>
    %21 = arith.shrsi %7, %20 : vector<12x12xi32>
    %c1_i32_5 = arith.constant 1 : i32
    %22 = vector.broadcast %c1_i32_5 : i32 to vector<12x12xi32>
    %23 = arith.andi %21, %22 : vector<12x12xi32>
    %c1_i32_6 = arith.constant 1 : i32
    %24 = vector.broadcast %c1_i32_6 : i32 to vector<12x12xi32>
    %25 = arith.cmpi eq, %23, %24 : vector<12x12xi32>
    %c3_i32 = arith.constant 3 : i32
    %26 = vector.broadcast %c3_i32 : i32 to vector<12x12xi32>
    %27 = arith.shrsi %7, %26 : vector<12x12xi32>
    %c1_i32_7 = arith.constant 1 : i32
    %28 = vector.broadcast %c1_i32_7 : i32 to vector<12x12xi32>
    %29 = arith.andi %27, %28 : vector<12x12xi32>
    %c1_i32_8 = arith.constant 1 : i32
    %30 = vector.broadcast %c1_i32_8 : i32 to vector<12x12xi32>
    %31 = arith.cmpi eq, %29, %30 : vector<12x12xi32>
    %c0 = arith.constant 0 : index
    %c0_9 = arith.constant 0 : index
    %c0_10 = arith.constant 0 : index
    %32 = vector.load %arg1[%c0, %c0_9, %c0_10] : memref<1x12x42xbf16, #tpu.memory_space<vmem>>, vector<1x12x42xbf16>
    %33 = vector.shape_cast %32 : vector<1x12x42xbf16> to vector<12x42xbf16>
    %c0_11 = arith.constant 0 : index
    %c0_12 = arith.constant 0 : index
    %34 = vector.load %arg2[%c0_11, %c0_12] : memref<42x32xbf16, #tpu.memory_space<vmem>>, vector<42x32xbf16>
    %cst_13 = arith.constant dense<0.000000e+00> : vector<12x32xf32>
    %35 = tpu.matmul %33, %34, %cst_13 {dimension_numbers = #tpu.dot_dimension_numbers<[1], [0], [0], [1], [0, 0, 1, 1], [], []>} : vector<12x42xbf16>, vector<42x32xbf16>, vector<12x32xf32> -> vector<12x32xf32>
    %c0_i32_14 = arith.constant 0 : i32
    %c2_i32_15 = arith.constant 2 : i32
    %36 = arith.addi %c0_i32_14, %c2_i32_15 : i32
    %c1_i32_16 = arith.constant 1 : i32
    %37 = scf.for %arg19 = %c0_i32_14 to %36 step %c1_i32_16 iter_args(%arg20 = %35) -> (vector<12x32xf32>)  : i32 {
      %47 = arith.index_cast %arg19 : i32 to index
      %c0_26 = arith.constant 0 : index
      %c0_27 = arith.constant 0 : index
      %48 = vector.load %arg3[%47, %c0_26, %c0_27] : memref<2x1x32xf32, #tpu.memory_space<vmem>>, vector<1x1x32xf32>
      %49 = vector.shape_cast %48 : vector<1x1x32xf32> to vector<1x32xf32>
      %50 = arith.index_cast %arg19 : i32 to index
      %c0_28 = arith.constant 0 : index
      %c0_29 = arith.constant 0 : index
      %51 = vector.load %arg4[%50, %c0_28, %c0_29] : memref<2x1x32xf32, #tpu.memory_space<vmem>>, vector<1x1x32xf32>
      %52 = vector.shape_cast %51 : vector<1x1x32xf32> to vector<1x32xf32>
      %cst_30 = arith.constant dense<0.000000e+00> : vector<12xf32>
      %53 = vector.multi_reduction <add>, %arg20, %cst_30 [1] : vector<12x32xf32> to vector<12xf32>
      %54 = vector.shape_cast %53 : vector<12xf32> to vector<12x1xf32>
      %cst_31 = arith.constant 3.200000e+01 : f32
      %55 = vector.broadcast %cst_31 : f32 to vector<12x1xf32>
      %56 = arith.divf %54, %55 : vector<12x1xf32>
      %57 = vector.broadcast %56 : vector<12x1xf32> to vector<12x32xf32>
      %58 = arith.subf %arg20, %57 : vector<12x32xf32>
      %59 = arith.mulf %58, %58 : vector<12x32xf32>
      %cst_32 = arith.constant dense<0.000000e+00> : vector<12xf32>
      %60 = vector.multi_reduction <add>, %59, %cst_32 [1] : vector<12x32xf32> to vector<12xf32>
      %61 = vector.shape_cast %60 : vector<12xf32> to vector<12x1xf32>
      %cst_33 = arith.constant 3.200000e+01 : f32
      %62 = vector.broadcast %cst_33 : f32 to vector<12x1xf32>
      %63 = arith.divf %61, %62 : vector<12x1xf32>
      %64 = vector.broadcast %56 : vector<12x1xf32> to vector<12x32xf32>
      %65 = arith.subf %arg20, %64 : vector<12x32xf32>
      %cst_34 = arith.constant 9.99999974E-6 : f32
      %66 = vector.broadcast %cst_34 : f32 to vector<12x1xf32>
      %67 = arith.addf %63, %66 : vector<12x1xf32>
      %68 = math.rsqrt %67 : vector<12x1xf32>
      %69 = vector.broadcast %68 : vector<12x1xf32> to vector<12x32xf32>
      %70 = arith.mulf %65, %69 : vector<12x32xf32>
      %71 = vector.broadcast %49 : vector<1x32xf32> to vector<12x32xf32>
      %72 = arith.mulf %70, %71 : vector<12x32xf32>
      %73 = vector.broadcast %52 : vector<1x32xf32> to vector<12x32xf32>
      %74 = arith.addf %72, %73 : vector<12x32xf32>
      %75 = arith.truncf %74 : vector<12x32xf32> to vector<12x32xbf16>
      %76 = arith.index_cast %arg19 : i32 to index
      %c0_35 = arith.constant 0 : index
      %c0_36 = arith.constant 0 : index
      %77 = vector.load %arg5[%76, %c0_35, %c0_36] : memref<2x32x96xbf16, #tpu.memory_space<vmem>>, vector<1x32x96xbf16>
      %78 = vector.shape_cast %77 : vector<1x32x96xbf16> to vector<32x96xbf16>
      %cst_37 = arith.constant dense<0.000000e+00> : vector<12x96xf32>
      %79 = tpu.matmul %75, %78, %cst_37 {dimension_numbers = #tpu.dot_dimension_numbers<[1], [0], [0], [1], [0, 0, 1, 1], [], []>} : vector<12x32xbf16>, vector<32x96xbf16>, vector<12x96xf32> -> vector<12x96xf32>
      %80 = arith.index_cast %arg19 : i32 to index
      %c0_38 = arith.constant 0 : index
      %c0_39 = arith.constant 0 : index
      %81 = vector.load %arg6[%80, %c0_38, %c0_39] : memref<2x1x96xf32, #tpu.memory_space<vmem>>, vector<1x1x96xf32>
      %82 = vector.shape_cast %81 : vector<1x1x96xf32> to vector<1x96xf32>
      %83 = vector.broadcast %82 : vector<1x96xf32> to vector<12x96xf32>
      %84 = arith.addf %79, %83 : vector<12x96xf32>
      %85 = arith.index_cast %arg19 : i32 to index
      %c0_40 = arith.constant 0 : index
      %c0_41 = arith.constant 0 : index
      %86 = vector.load %arg7[%85, %c0_40, %c0_41] : memref<2x12x8xbf16, #tpu.memory_space<vmem>>, vector<1x12x8xbf16>
      %87 = vector.shape_cast %86 : vector<1x12x8xbf16> to vector<12x8xbf16>
      %88 = vector.extract_strided_slice %84 {offsets = [0, 0], sizes = [12, 8], strides = [1, 1]} : vector<12x96xf32> to vector<12x8xf32>
      %89 = arith.truncf %88 : vector<12x8xf32> to vector<12x8xbf16>
      %90 = vector.extract_strided_slice %84 {offsets = [0, 32], sizes = [12, 8], strides = [1, 1]} : vector<12x96xf32> to vector<12x8xf32>
      %91 = arith.truncf %90 : vector<12x8xf32> to vector<12x8xbf16>
      %92 = vector.extract_strided_slice %84 {offsets = [0, 64], sizes = [12, 8], strides = [1, 1]} : vector<12x96xf32> to vector<12x8xf32>
      %93 = arith.truncf %92 : vector<12x8xf32> to vector<12x8xbf16>
      %cst_42 = arith.constant dense<0.000000e+00> : vector<12x12xf32>
      %94 = tpu.matmul %89, %91, %cst_42 {dimension_numbers = #tpu.dot_dimension_numbers<[1], [1], [0], [0], [0, 0, 1, 0], [], []>} : vector<12x8xbf16>, vector<12x8xbf16>, vector<12x12xf32> -> vector<12x12xf32>
      %cst_43 = arith.constant dense<0.000000e+00> : vector<12x12xf32>
      %95 = tpu.matmul %89, %87, %cst_43 {dimension_numbers = #tpu.dot_dimension_numbers<[1], [1], [0], [0], [0, 0, 1, 0], [], []>} : vector<12x8xbf16>, vector<12x8xbf16>, vector<12x12xf32> -> vector<12x12xf32>
      %96 = vector.extract_strided_slice %95 {offsets = [0, 1], sizes = [12, 11], strides = [1, 1]} : vector<12x12xf32> to vector<12x11xf32>
      %97 = vector.extract_strided_slice %95 {offsets = [0, 0], sizes = [12, 1], strides = [1, 1]} : vector<12x12xf32> to vector<12x1xf32>
      %98 = tpu.concatenate %96, %97 in 1 : vector<12x11xf32>, vector<12x1xf32> -> vector<12x12xf32>
      %99 = arith.select %13, %98, %95 : vector<12x12xi1>, vector<12x12xf32>
      %100 = vector.extract_strided_slice %99 {offsets = [0, 2], sizes = [12, 10], strides = [1, 1]} : vector<12x12xf32> to vector<12x10xf32>
      %101 = vector.extract_strided_slice %99 {offsets = [0, 0], sizes = [12, 2], strides = [1, 1]} : vector<12x12xf32> to vector<12x2xf32>
      %102 = tpu.concatenate %100, %101 in 1 : vector<12x10xf32>, vector<12x2xf32> -> vector<12x12xf32>
      %103 = arith.select %19, %102, %99 : vector<12x12xi1>, vector<12x12xf32>
      %104 = vector.extract_strided_slice %103 {offsets = [0, 4], sizes = [12, 8], strides = [1, 1]} : vector<12x12xf32> to vector<12x8xf32>
      %105 = vector.extract_strided_slice %103 {offsets = [0, 0], sizes = [12, 4], strides = [1, 1]} : vector<12x12xf32> to vector<12x4xf32>
      %106 = tpu.concatenate %104, %105 in 1 : vector<12x8xf32>, vector<12x4xf32> -> vector<12x12xf32>
      %107 = arith.select %25, %106, %103 : vector<12x12xi1>, vector<12x12xf32>
      %108 = vector.extract_strided_slice %107 {offsets = [0, 8], sizes = [12, 4], strides = [1, 1]} : vector<12x12xf32> to vector<12x4xf32>
      %109 = vector.extract_strided_slice %107 {offsets = [0, 0], sizes = [12, 8], strides = [1, 1]} : vector<12x12xf32> to vector<12x8xf32>
      %110 = tpu.concatenate %108, %109 in 1 : vector<12x4xf32>, vector<12x8xf32> -> vector<12x12xf32>
      %111 = arith.select %31, %110, %107 : vector<12x12xi1>, vector<12x12xf32>
      %112 = arith.addf %94, %111 : vector<12x12xf32>
      %113 = arith.addf %112, %5 : vector<12x12xf32>
      %cst_44 = arith.constant dense<0xFF800000> : vector<12xf32>
      %114 = vector.multi_reduction <maximumf>, %113, %cst_44 [1] : vector<12x12xf32> to vector<12xf32>
      %115 = vector.shape_cast %114 : vector<12xf32> to vector<12x1xf32>
      %116 = vector.broadcast %115 : vector<12x1xf32> to vector<12x12xf32>
      %117 = arith.subf %113, %116 : vector<12x12xf32>
      %118 = math.exp %117 : vector<12x12xf32>
      %cst_45 = arith.constant dense<0.000000e+00> : vector<12xf32>
      %119 = vector.multi_reduction <add>, %118, %cst_45 [1] : vector<12x12xf32> to vector<12xf32>
      %120 = vector.shape_cast %119 : vector<12xf32> to vector<12x1xf32>
      %121 = tpu.reciprocal %120 {approx = true} : vector<12x1xf32> -> vector<12x1xf32>
      %122 = vector.broadcast %121 : vector<12x1xf32> to vector<12x12xf32>
      %123 = arith.mulf %118, %122 : vector<12x12xf32>
      %124 = arith.truncf %123 : vector<12x12xf32> to vector<12x12xbf16>
      %cst_46 = arith.constant dense<0.000000e+00> : vector<12x8xf32>
      %125 = tpu.matmul %124, %93, %cst_46 {dimension_numbers = #tpu.dot_dimension_numbers<[1], [0], [0], [1], [0, 0, 1, 1], [], []>} : vector<12x12xbf16>, vector<12x8xbf16>, vector<12x8xf32> -> vector<12x8xf32>
      %126 = vector.extract_strided_slice %84 {offsets = [0, 8], sizes = [12, 8], strides = [1, 1]} : vector<12x96xf32> to vector<12x8xf32>
      %127 = arith.truncf %126 : vector<12x8xf32> to vector<12x8xbf16>
      %128 = vector.extract_strided_slice %84 {offsets = [0, 40], sizes = [12, 8], strides = [1, 1]} : vector<12x96xf32> to vector<12x8xf32>
      %129 = arith.truncf %128 : vector<12x8xf32> to vector<12x8xbf16>
      %130 = vector.extract_strided_slice %84 {offsets = [0, 72], sizes = [12, 8], strides = [1, 1]} : vector<12x96xf32> to vector<12x8xf32>
      %131 = arith.truncf %130 : vector<12x8xf32> to vector<12x8xbf16>
      %cst_47 = arith.constant dense<0.000000e+00> : vector<12x12xf32>
      %132 = tpu.matmul %127, %129, %cst_47 {dimension_numbers = #tpu.dot_dimension_numbers<[1], [1], [0], [0], [0, 0, 1, 0], [], []>} : vector<12x8xbf16>, vector<12x8xbf16>, vector<12x12xf32> -> vector<12x12xf32>
      %cst_48 = arith.constant dense<0.000000e+00> : vector<12x12xf32>
      %133 = tpu.matmul %127, %87, %cst_48 {dimension_numbers = #tpu.dot_dimension_numbers<[1], [1], [0], [0], [0, 0, 1, 0], [], []>} : vector<12x8xbf16>, vector<12x8xbf16>, vector<12x12xf32> -> vector<12x12xf32>
      %134 = vector.extract_strided_slice %133 {offsets = [0, 1], sizes = [12, 11], strides = [1, 1]} : vector<12x12xf32> to vector<12x11xf32>
      %135 = vector.extract_strided_slice %133 {offsets = [0, 0], sizes = [12, 1], strides = [1, 1]} : vector<12x12xf32> to vector<12x1xf32>
      %136 = tpu.concatenate %134, %135 in 1 : vector<12x11xf32>, vector<12x1xf32> -> vector<12x12xf32>
      %137 = arith.select %13, %136, %133 : vector<12x12xi1>, vector<12x12xf32>
      %138 = vector.extract_strided_slice %137 {offsets = [0, 2], sizes = [12, 10], strides = [1, 1]} : vector<12x12xf32> to vector<12x10xf32>
      %139 = vector.extract_strided_slice %137 {offsets = [0, 0], sizes = [12, 2], strides = [1, 1]} : vector<12x12xf32> to vector<12x2xf32>
      %140 = tpu.concatenate %138, %139 in 1 : vector<12x10xf32>, vector<12x2xf32> -> vector<12x12xf32>
      %141 = arith.select %19, %140, %137 : vector<12x12xi1>, vector<12x12xf32>
      %142 = vector.extract_strided_slice %141 {offsets = [0, 4], sizes = [12, 8], strides = [1, 1]} : vector<12x12xf32> to vector<12x8xf32>
      %143 = vector.extract_strided_slice %141 {offsets = [0, 0], sizes = [12, 4], strides = [1, 1]} : vector<12x12xf32> to vector<12x4xf32>
      %144 = tpu.concatenate %142, %143 in 1 : vector<12x8xf32>, vector<12x4xf32> -> vector<12x12xf32>
      %145 = arith.select %25, %144, %141 : vector<12x12xi1>, vector<12x12xf32>
      %146 = vector.extract_strided_slice %145 {offsets = [0, 8], sizes = [12, 4], strides = [1, 1]} : vector<12x12xf32> to vector<12x4xf32>
      %147 = vector.extract_strided_slice %145 {offsets = [0, 0], sizes = [12, 8], strides = [1, 1]} : vector<12x12xf32> to vector<12x8xf32>
      %148 = tpu.concatenate %146, %147 in 1 : vector<12x4xf32>, vector<12x8xf32> -> vector<12x12xf32>
      %149 = arith.select %31, %148, %145 : vector<12x12xi1>, vector<12x12xf32>
      %150 = arith.addf %132, %149 : vector<12x12xf32>
      %151 = arith.addf %150, %5 : vector<12x12xf32>
      %cst_49 = arith.constant dense<0xFF800000> : vector<12xf32>
      %152 = vector.multi_reduction <maximumf>, %151, %cst_49 [1] : vector<12x12xf32> to vector<12xf32>
      %153 = vector.shape_cast %152 : vector<12xf32> to vector<12x1xf32>
      %154 = vector.broadcast %153 : vector<12x1xf32> to vector<12x12xf32>
      %155 = arith.subf %151, %154 : vector<12x12xf32>
      %156 = math.exp %155 : vector<12x12xf32>
      %cst_50 = arith.constant dense<0.000000e+00> : vector<12xf32>
      %157 = vector.multi_reduction <add>, %156, %cst_50 [1] : vector<12x12xf32> to vector<12xf32>
      %158 = vector.shape_cast %157 : vector<12xf32> to vector<12x1xf32>
      %159 = tpu.reciprocal %158 {approx = true} : vector<12x1xf32> -> vector<12x1xf32>
      %160 = vector.broadcast %159 : vector<12x1xf32> to vector<12x12xf32>
      %161 = arith.mulf %156, %160 : vector<12x12xf32>
      %162 = arith.truncf %161 : vector<12x12xf32> to vector<12x12xbf16>
      %cst_51 = arith.constant dense<0.000000e+00> : vector<12x8xf32>
      %163 = tpu.matmul %162, %131, %cst_51 {dimension_numbers = #tpu.dot_dimension_numbers<[1], [0], [0], [1], [0, 0, 1, 1], [], []>} : vector<12x12xbf16>, vector<12x8xbf16>, vector<12x8xf32> -> vector<12x8xf32>
      %164 = vector.extract_strided_slice %84 {offsets = [0, 16], sizes = [12, 8], strides = [1, 1]} : vector<12x96xf32> to vector<12x8xf32>
      %165 = arith.truncf %164 : vector<12x8xf32> to vector<12x8xbf16>
      %166 = vector.extract_strided_slice %84 {offsets = [0, 48], sizes = [12, 8], strides = [1, 1]} : vector<12x96xf32> to vector<12x8xf32>
      %167 = arith.truncf %166 : vector<12x8xf32> to vector<12x8xbf16>
      %168 = vector.extract_strided_slice %84 {offsets = [0, 80], sizes = [12, 8], strides = [1, 1]} : vector<12x96xf32> to vector<12x8xf32>
      %169 = arith.truncf %168 : vector<12x8xf32> to vector<12x8xbf16>
      %cst_52 = arith.constant dense<0.000000e+00> : vector<12x12xf32>
      %170 = tpu.matmul %165, %167, %cst_52 {dimension_numbers = #tpu.dot_dimension_numbers<[1], [1], [0], [0], [0, 0, 1, 0], [], []>} : vector<12x8xbf16>, vector<12x8xbf16>, vector<12x12xf32> -> vector<12x12xf32>
      %cst_53 = arith.constant dense<0.000000e+00> : vector<12x12xf32>
      %171 = tpu.matmul %165, %87, %cst_53 {dimension_numbers = #tpu.dot_dimension_numbers<[1], [1], [0], [0], [0, 0, 1, 0], [], []>} : vector<12x8xbf16>, vector<12x8xbf16>, vector<12x12xf32> -> vector<12x12xf32>
      %172 = vector.extract_strided_slice %171 {offsets = [0, 1], sizes = [12, 11], strides = [1, 1]} : vector<12x12xf32> to vector<12x11xf32>
      %173 = vector.extract_strided_slice %171 {offsets = [0, 0], sizes = [12, 1], strides = [1, 1]} : vector<12x12xf32> to vector<12x1xf32>
      %174 = tpu.concatenate %172, %173 in 1 : vector<12x11xf32>, vector<12x1xf32> -> vector<12x12xf32>
      %175 = arith.select %13, %174, %171 : vector<12x12xi1>, vector<12x12xf32>
      %176 = vector.extract_strided_slice %175 {offsets = [0, 2], sizes = [12, 10], strides = [1, 1]} : vector<12x12xf32> to vector<12x10xf32>
      %177 = vector.extract_strided_slice %175 {offsets = [0, 0], sizes = [12, 2], strides = [1, 1]} : vector<12x12xf32> to vector<12x2xf32>
      %178 = tpu.concatenate %176, %177 in 1 : vector<12x10xf32>, vector<12x2xf32> -> vector<12x12xf32>
      %179 = arith.select %19, %178, %175 : vector<12x12xi1>, vector<12x12xf32>
      %180 = vector.extract_strided_slice %179 {offsets = [0, 4], sizes = [12, 8], strides = [1, 1]} : vector<12x12xf32> to vector<12x8xf32>
      %181 = vector.extract_strided_slice %179 {offsets = [0, 0], sizes = [12, 4], strides = [1, 1]} : vector<12x12xf32> to vector<12x4xf32>
      %182 = tpu.concatenate %180, %181 in 1 : vector<12x8xf32>, vector<12x4xf32> -> vector<12x12xf32>
      %183 = arith.select %25, %182, %179 : vector<12x12xi1>, vector<12x12xf32>
      %184 = vector.extract_strided_slice %183 {offsets = [0, 8], sizes = [12, 4], strides = [1, 1]} : vector<12x12xf32> to vector<12x4xf32>
      %185 = vector.extract_strided_slice %183 {offsets = [0, 0], sizes = [12, 8], strides = [1, 1]} : vector<12x12xf32> to vector<12x8xf32>
      %186 = tpu.concatenate %184, %185 in 1 : vector<12x4xf32>, vector<12x8xf32> -> vector<12x12xf32>
      %187 = arith.select %31, %186, %183 : vector<12x12xi1>, vector<12x12xf32>
      %188 = arith.addf %170, %187 : vector<12x12xf32>
      %189 = arith.addf %188, %5 : vector<12x12xf32>
      %cst_54 = arith.constant dense<0xFF800000> : vector<12xf32>
      %190 = vector.multi_reduction <maximumf>, %189, %cst_54 [1] : vector<12x12xf32> to vector<12xf32>
      %191 = vector.shape_cast %190 : vector<12xf32> to vector<12x1xf32>
      %192 = vector.broadcast %191 : vector<12x1xf32> to vector<12x12xf32>
      %193 = arith.subf %189, %192 : vector<12x12xf32>
      %194 = math.exp %193 : vector<12x12xf32>
      %cst_55 = arith.constant dense<0.000000e+00> : vector<12xf32>
      %195 = vector.multi_reduction <add>, %194, %cst_55 [1] : vector<12x12xf32> to vector<12xf32>
      %196 = vector.shape_cast %195 : vector<12xf32> to vector<12x1xf32>
      %197 = tpu.reciprocal %196 {approx = true} : vector<12x1xf32> -> vector<12x1xf32>
      %198 = vector.broadcast %197 : vector<12x1xf32> to vector<12x12xf32>
      %199 = arith.mulf %194, %198 : vector<12x12xf32>
      %200 = arith.truncf %199 : vector<12x12xf32> to vector<12x12xbf16>
      %cst_56 = arith.constant dense<0.000000e+00> : vector<12x8xf32>
      %201 = tpu.matmul %200, %169, %cst_56 {dimension_numbers = #tpu.dot_dimension_numbers<[1], [0], [0], [1], [0, 0, 1, 1], [], []>} : vector<12x12xbf16>, vector<12x8xbf16>, vector<12x8xf32> -> vector<12x8xf32>
      %202 = vector.extract_strided_slice %84 {offsets = [0, 24], sizes = [12, 8], strides = [1, 1]} : vector<12x96xf32> to vector<12x8xf32>
      %203 = arith.truncf %202 : vector<12x8xf32> to vector<12x8xbf16>
      %204 = vector.extract_strided_slice %84 {offsets = [0, 56], sizes = [12, 8], strides = [1, 1]} : vector<12x96xf32> to vector<12x8xf32>
      %205 = arith.truncf %204 : vector<12x8xf32> to vector<12x8xbf16>
      %206 = vector.extract_strided_slice %84 {offsets = [0, 88], sizes = [12, 8], strides = [1, 1]} : vector<12x96xf32> to vector<12x8xf32>
      %207 = arith.truncf %206 : vector<12x8xf32> to vector<12x8xbf16>
      %cst_57 = arith.constant dense<0.000000e+00> : vector<12x12xf32>
      %208 = tpu.matmul %203, %205, %cst_57 {dimension_numbers = #tpu.dot_dimension_numbers<[1], [1], [0], [0], [0, 0, 1, 0], [], []>} : vector<12x8xbf16>, vector<12x8xbf16>, vector<12x12xf32> -> vector<12x12xf32>
      %cst_58 = arith.constant dense<0.000000e+00> : vector<12x12xf32>
      %209 = tpu.matmul %203, %87, %cst_58 {dimension_numbers = #tpu.dot_dimension_numbers<[1], [1], [0], [0], [0, 0, 1, 0], [], []>} : vector<12x8xbf16>, vector<12x8xbf16>, vector<12x12xf32> -> vector<12x12xf32>
      %210 = vector.extract_strided_slice %209 {offsets = [0, 1], sizes = [12, 11], strides = [1, 1]} : vector<12x12xf32> to vector<12x11xf32>
      %211 = vector.extract_strided_slice %209 {offsets = [0, 0], sizes = [12, 1], strides = [1, 1]} : vector<12x12xf32> to vector<12x1xf32>
      %212 = tpu.concatenate %210, %211 in 1 : vector<12x11xf32>, vector<12x1xf32> -> vector<12x12xf32>
      %213 = arith.select %13, %212, %209 : vector<12x12xi1>, vector<12x12xf32>
      %214 = vector.extract_strided_slice %213 {offsets = [0, 2], sizes = [12, 10], strides = [1, 1]} : vector<12x12xf32> to vector<12x10xf32>
      %215 = vector.extract_strided_slice %213 {offsets = [0, 0], sizes = [12, 2], strides = [1, 1]} : vector<12x12xf32> to vector<12x2xf32>
      %216 = tpu.concatenate %214, %215 in 1 : vector<12x10xf32>, vector<12x2xf32> -> vector<12x12xf32>
      %217 = arith.select %19, %216, %213 : vector<12x12xi1>, vector<12x12xf32>
      %218 = vector.extract_strided_slice %217 {offsets = [0, 4], sizes = [12, 8], strides = [1, 1]} : vector<12x12xf32> to vector<12x8xf32>
      %219 = vector.extract_strided_slice %217 {offsets = [0, 0], sizes = [12, 4], strides = [1, 1]} : vector<12x12xf32> to vector<12x4xf32>
      %220 = tpu.concatenate %218, %219 in 1 : vector<12x8xf32>, vector<12x4xf32> -> vector<12x12xf32>
      %221 = arith.select %25, %220, %217 : vector<12x12xi1>, vector<12x12xf32>
      %222 = vector.extract_strided_slice %221 {offsets = [0, 8], sizes = [12, 4], strides = [1, 1]} : vector<12x12xf32> to vector<12x4xf32>
      %223 = vector.extract_strided_slice %221 {offsets = [0, 0], sizes = [12, 8], strides = [1, 1]} : vector<12x12xf32> to vector<12x8xf32>
      %224 = tpu.concatenate %222, %223 in 1 : vector<12x4xf32>, vector<12x8xf32> -> vector<12x12xf32>
      %225 = arith.select %31, %224, %221 : vector<12x12xi1>, vector<12x12xf32>
      %226 = arith.addf %208, %225 : vector<12x12xf32>
      %227 = arith.addf %226, %5 : vector<12x12xf32>
      %cst_59 = arith.constant dense<0xFF800000> : vector<12xf32>
      %228 = vector.multi_reduction <maximumf>, %227, %cst_59 [1] : vector<12x12xf32> to vector<12xf32>
      %229 = vector.shape_cast %228 : vector<12xf32> to vector<12x1xf32>
      %230 = vector.broadcast %229 : vector<12x1xf32> to vector<12x12xf32>
      %231 = arith.subf %227, %230 : vector<12x12xf32>
      %232 = math.exp %231 : vector<12x12xf32>
      %cst_60 = arith.constant dense<0.000000e+00> : vector<12xf32>
      %233 = vector.multi_reduction <add>, %232, %cst_60 [1] : vector<12x12xf32> to vector<12xf32>
      %234 = vector.shape_cast %233 : vector<12xf32> to vector<12x1xf32>
      %235 = tpu.reciprocal %234 {approx = true} : vector<12x1xf32> -> vector<12x1xf32>
      %236 = vector.broadcast %235 : vector<12x1xf32> to vector<12x12xf32>
      %237 = arith.mulf %232, %236 : vector<12x12xf32>
      %238 = arith.truncf %237 : vector<12x12xf32> to vector<12x12xbf16>
      %cst_61 = arith.constant dense<0.000000e+00> : vector<12x8xf32>
      %239 = tpu.matmul %238, %207, %cst_61 {dimension_numbers = #tpu.dot_dimension_numbers<[1], [0], [0], [1], [0, 0, 1, 1], [], []>} : vector<12x12xbf16>, vector<12x8xbf16>, vector<12x8xf32> -> vector<12x8xf32>
      %240 = tpu.concatenate %125, %163, %201, %239 in 1 : vector<12x8xf32>, vector<12x8xf32>, vector<12x8xf32>, vector<12x8xf32> -> vector<12x32xf32>
      %241 = arith.truncf %240 : vector<12x32xf32> to vector<12x32xbf16>
      %242 = arith.index_cast %arg19 : i32 to index
      %c0_62 = arith.constant 0 : index
      %c0_63 = arith.constant 0 : index
      %243 = vector.load %arg8[%242, %c0_62, %c0_63] : memref<2x32x32xbf16, #tpu.memory_space<vmem>>, vector<1x32x32xbf16>
      %244 = vector.shape_cast %243 : vector<1x32x32xbf16> to vector<32x32xbf16>
      %cst_64 = arith.constant dense<0.000000e+00> : vector<12x32xf32>
      %245 = tpu.matmul %241, %244, %cst_64 {dimension_numbers = #tpu.dot_dimension_numbers<[1], [0], [0], [1], [0, 0, 1, 1], [], []>} : vector<12x32xbf16>, vector<32x32xbf16>, vector<12x32xf32> -> vector<12x32xf32>
      %246 = arith.addf %arg20, %245 : vector<12x32xf32>
      %247 = arith.index_cast %arg19 : i32 to index
      %c0_65 = arith.constant 0 : index
      %c0_66 = arith.constant 0 : index
      %248 = vector.load %arg9[%247, %c0_65, %c0_66] : memref<2x1x32xf32, #tpu.memory_space<vmem>>, vector<1x1x32xf32>
      %249 = vector.shape_cast %248 : vector<1x1x32xf32> to vector<1x32xf32>
      %250 = vector.broadcast %249 : vector<1x32xf32> to vector<12x32xf32>
      %251 = arith.addf %246, %250 : vector<12x32xf32>
      %252 = arith.index_cast %arg19 : i32 to index
      %c0_67 = arith.constant 0 : index
      %c0_68 = arith.constant 0 : index
      %253 = vector.load %arg10[%252, %c0_67, %c0_68] : memref<2x1x32xf32, #tpu.memory_space<vmem>>, vector<1x1x32xf32>
      %254 = vector.shape_cast %253 : vector<1x1x32xf32> to vector<1x32xf32>
      %255 = arith.index_cast %arg19 : i32 to index
      %c0_69 = arith.constant 0 : index
      %c0_70 = arith.constant 0 : index
      %256 = vector.load %arg11[%255, %c0_69, %c0_70] : memref<2x1x32xf32, #tpu.memory_space<vmem>>, vector<1x1x32xf32>
      %257 = vector.shape_cast %256 : vector<1x1x32xf32> to vector<1x32xf32>
      %cst_71 = arith.constant dense<0.000000e+00> : vector<12xf32>
      %258 = vector.multi_reduction <add>, %251, %cst_71 [1] : vector<12x32xf32> to vector<12xf32>
      %259 = vector.shape_cast %258 : vector<12xf32> to vector<12x1xf32>
      %cst_72 = arith.constant 3.200000e+01 : f32
      %260 = vector.broadcast %cst_72 : f32 to vector<12x1xf32>
      %261 = arith.divf %259, %260 : vector<12x1xf32>
      %262 = vector.broadcast %261 : vector<12x1xf32> to vector<12x32xf32>
      %263 = arith.subf %251, %262 : vector<12x32xf32>
      %264 = arith.mulf %263, %263 : vector<12x32xf32>
      %cst_73 = arith.constant dense<0.000000e+00> : vector<12xf32>
      %265 = vector.multi_reduction <add>, %264, %cst_73 [1] : vector<12x32xf32> to vector<12xf32>
      %266 = vector.shape_cast %265 : vector<12xf32> to vector<12x1xf32>
      %cst_74 = arith.constant 3.200000e+01 : f32
      %267 = vector.broadcast %cst_74 : f32 to vector<12x1xf32>
      %268 = arith.divf %266, %267 : vector<12x1xf32>
      %269 = vector.broadcast %261 : vector<12x1xf32> to vector<12x32xf32>
      %270 = arith.subf %251, %269 : vector<12x32xf32>
      %cst_75 = arith.constant 9.99999974E-6 : f32
      %271 = vector.broadcast %cst_75 : f32 to vector<12x1xf32>
      %272 = arith.addf %268, %271 : vector<12x1xf32>
      %273 = math.rsqrt %272 : vector<12x1xf32>
      %274 = vector.broadcast %273 : vector<12x1xf32> to vector<12x32xf32>
      %275 = arith.mulf %270, %274 : vector<12x32xf32>
      %276 = vector.broadcast %254 : vector<1x32xf32> to vector<12x32xf32>
      %277 = arith.mulf %275, %276 : vector<12x32xf32>
      %278 = vector.broadcast %257 : vector<1x32xf32> to vector<12x32xf32>
      %279 = arith.addf %277, %278 : vector<12x32xf32>
      %280 = arith.truncf %279 : vector<12x32xf32> to vector<12x32xbf16>
      %281 = arith.index_cast %arg19 : i32 to index
      %c0_76 = arith.constant 0 : index
      %c0_77 = arith.constant 0 : index
      %282 = vector.load %arg12[%281, %c0_76, %c0_77] : memref<2x32x128xbf16, #tpu.memory_space<vmem>>, vector<1x32x128xbf16>
      %283 = vector.shape_cast %282 : vector<1x32x128xbf16> to vector<32x128xbf16>
      %cst_78 = arith.constant dense<0.000000e+00> : vector<12x128xf32>
      %284 = tpu.matmul %280, %283, %cst_78 {dimension_numbers = #tpu.dot_dimension_numbers<[1], [0], [0], [1], [0, 0, 1, 1], [], []>} : vector<12x32xbf16>, vector<32x128xbf16>, vector<12x128xf32> -> vector<12x128xf32>
      %285 = arith.index_cast %arg19 : i32 to index
      %c0_79 = arith.constant 0 : index
      %c0_80 = arith.constant 0 : index
      %286 = vector.load %arg13[%285, %c0_79, %c0_80] : memref<2x1x128xf32, #tpu.memory_space<vmem>>, vector<1x1x128xf32>
      %287 = vector.shape_cast %286 : vector<1x1x128xf32> to vector<1x128xf32>
      %288 = vector.broadcast %287 : vector<1x128xf32> to vector<12x128xf32>
      %289 = arith.addf %284, %288 : vector<12x128xf32>
      %290 = arith.mulf %289, %289 : vector<12x128xf32>
      %291 = arith.mulf %289, %290 : vector<12x128xf32>
      %cst_81 = arith.constant 4.471500e-02 : f32
      %292 = vector.broadcast %cst_81 : f32 to vector<12x128xf32>
      %293 = arith.mulf %292, %291 : vector<12x128xf32>
      %294 = arith.addf %289, %293 : vector<12x128xf32>
      %cst_82 = arith.constant 0.797884583 : f32
      %295 = vector.broadcast %cst_82 : f32 to vector<12x128xf32>
      %296 = arith.mulf %295, %294 : vector<12x128xf32>
      %297 = math.tanh %296 : vector<12x128xf32>
      %cst_83 = arith.constant 1.000000e+00 : f32
      %298 = vector.broadcast %cst_83 : f32 to vector<12x128xf32>
      %299 = arith.addf %298, %297 : vector<12x128xf32>
      %cst_84 = arith.constant 5.000000e-01 : f32
      %300 = vector.broadcast %cst_84 : f32 to vector<12x128xf32>
      %301 = arith.mulf %300, %299 : vector<12x128xf32>
      %302 = arith.mulf %289, %301 : vector<12x128xf32>
      %303 = arith.truncf %302 : vector<12x128xf32> to vector<12x128xbf16>
      %304 = arith.index_cast %arg19 : i32 to index
      %c0_85 = arith.constant 0 : index
      %c0_86 = arith.constant 0 : index
      %305 = vector.load %arg14[%304, %c0_85, %c0_86] : memref<2x128x32xbf16, #tpu.memory_space<vmem>>, vector<1x128x32xbf16>
      %306 = vector.shape_cast %305 : vector<1x128x32xbf16> to vector<128x32xbf16>
      %cst_87 = arith.constant dense<0.000000e+00> : vector<12x32xf32>
      %307 = tpu.matmul %303, %306, %cst_87 {dimension_numbers = #tpu.dot_dimension_numbers<[1], [0], [0], [1], [0, 0, 1, 1], [], []>} : vector<12x128xbf16>, vector<128x32xbf16>, vector<12x32xf32> -> vector<12x32xf32>
      %308 = arith.addf %251, %307 : vector<12x32xf32>
      %309 = arith.index_cast %arg19 : i32 to index
      %c0_88 = arith.constant 0 : index
      %c0_89 = arith.constant 0 : index
      %310 = vector.load %arg15[%309, %c0_88, %c0_89] : memref<2x1x32xf32, #tpu.memory_space<vmem>>, vector<1x1x32xf32>
      %311 = vector.shape_cast %310 : vector<1x1x32xf32> to vector<1x32xf32>
      %312 = vector.broadcast %311 : vector<1x32xf32> to vector<12x32xf32>
      %313 = arith.addf %308, %312 : vector<12x32xf32>
      scf.yield %313 : vector<12x32xf32>
    }
    %c2_i32_17 = arith.constant 2 : i32
    %38 = arith.truncf %37 : vector<12x32xf32> to vector<12x32xbf16>
    %c0_18 = arith.constant 0 : index
    %c0_19 = arith.constant 0 : index
    %39 = vector.load %arg16[%c0_18, %c0_19] : memref<32x128xbf16, #tpu.memory_space<vmem>>, vector<32x128xbf16>
    %cst_20 = arith.constant dense<0.000000e+00> : vector<12x128xf32>
    %40 = tpu.matmul %38, %39, %cst_20 {dimension_numbers = #tpu.dot_dimension_numbers<[1], [0], [0], [1], [0, 0, 1, 1], [], []>} : vector<12x32xbf16>, vector<32x128xbf16>, vector<12x128xf32> -> vector<12x128xf32>
    %c0_21 = arith.constant 0 : index
    %c0_22 = arith.constant 0 : index
    %41 = vector.load %arg17[%c0_21, %c0_22] : memref<1x128xf32, #tpu.memory_space<vmem>>, vector<1x128xf32>
    %42 = vector.broadcast %41 : vector<1x128xf32> to vector<12x128xf32>
    %43 = arith.addf %40, %42 : vector<12x128xf32>
    %c0_23 = arith.constant 0 : index
    %c0_24 = arith.constant 0 : index
    %c0_25 = arith.constant 0 : index
    %44 = vector.load %arg18[%c0_23, %c0_24, %c0_25] : memref<1x12x128xf32, #tpu.memory_space<vmem>>, vector<1x12x128xf32>
    %45 = vector.shape_cast %44 : vector<1x12x128xf32> to vector<12x128xf32>
    %46 = vector.shape_cast %43 : vector<12x128xf32> to vector<1x12x128xf32>
    tpu.vector_store %arg18[%c0_23, %c0_24, %c0_25], %46 {strides = array<i32>} : memref<1x12x128xf32, #tpu.memory_space<vmem>>, vector<1x12x128xf32>,
    return
  }
  func.func @transform_0(%arg0: i32) -> (i32, i32, i32) {
    %c0_i32 = arith.constant 0 : i32
    %c0_i32_0 = arith.constant 0 : i32
    %c0_i32_1 = arith.constant 0 : i32
    return %arg0, %c0_i32, %c0_i32_0 : i32, i32, i32
  }
  func.func @transform_1(%arg0: i32) -> (i32, i32) {
    %c0_i32 = arith.constant 0 : i32
    %c0_i32_0 = arith.constant 0 : i32
    %c0_i32_1 = arith.constant 0 : i32
    return %c0_i32, %c0_i32_0 : i32, i32
  }
  func.func @transform_2(%arg0: i32) -> (i32, i32, i32) {
    %c0_i32 = arith.constant 0 : i32
    %c0_i32_0 = arith.constant 0 : i32
    %c0_i32_1 = arith.constant 0 : i32
    %c0_i32_2 = arith.constant 0 : i32
    return %c0_i32, %c0_i32_0, %c0_i32_1 : i32, i32, i32
  }
  func.func @transform_3(%arg0: i32) -> (i32, i32, i32) {
    %c0_i32 = arith.constant 0 : i32
    %c0_i32_0 = arith.constant 0 : i32
    %c0_i32_1 = arith.constant 0 : i32
    %c0_i32_2 = arith.constant 0 : i32
    return %c0_i32, %c0_i32_0, %c0_i32_1 : i32, i32, i32
  }
  func.func @transform_4(%arg0: i32) -> (i32, i32, i32) {
    %c0_i32 = arith.constant 0 : i32
    %c0_i32_0 = arith.constant 0 : i32
    %c0_i32_1 = arith.constant 0 : i32
    %c0_i32_2 = arith.constant 0 : i32
    return %c0_i32, %c0_i32_0, %c0_i32_1 : i32, i32, i32
  }
  func.func @transform_5(%arg0: i32) -> (i32, i32, i32) {
    %c0_i32 = arith.constant 0 : i32
    %c0_i32_0 = arith.constant 0 : i32
    %c0_i32_1 = arith.constant 0 : i32
    %c0_i32_2 = arith.constant 0 : i32
    return %c0_i32, %c0_i32_0, %c0_i32_1 : i32, i32, i32
  }
  func.func @transform_6(%arg0: i32) -> (i32, i32, i32) {
    %c0_i32 = arith.constant 0 : i32
    %c0_i32_0 = arith.constant 0 : i32
    %c0_i32_1 = arith.constant 0 : i32
    %c0_i32_2 = arith.constant 0 : i32
    return %c0_i32, %c0_i32_0, %c0_i32_1 : i32, i32, i32
  }
  func.func @transform_7(%arg0: i32) -> (i32, i32, i32) {
    %c0_i32 = arith.constant 0 : i32
    %c0_i32_0 = arith.constant 0 : i32
    %c0_i32_1 = arith.constant 0 : i32
    %c0_i32_2 = arith.constant 0 : i32
    return %c0_i32, %c0_i32_0, %c0_i32_1 : i32, i32, i32
  }
  func.func @transform_8(%arg0: i32) -> (i32, i32, i32) {
    %c0_i32 = arith.constant 0 : i32
    %c0_i32_0 = arith.constant 0 : i32
    %c0_i32_1 = arith.constant 0 : i32
    %c0_i32_2 = arith.constant 0 : i32
    return %c0_i32, %c0_i32_0, %c0_i32_1 : i32, i32, i32
  }
  func.func @transform_9(%arg0: i32) -> (i32, i32, i32) {
    %c0_i32 = arith.constant 0 : i32
    %c0_i32_0 = arith.constant 0 : i32
    %c0_i32_1 = arith.constant 0 : i32
    %c0_i32_2 = arith.constant 0 : i32
    return %c0_i32, %c0_i32_0, %c0_i32_1 : i32, i32, i32
  }
  func.func @transform_10(%arg0: i32) -> (i32, i32, i32) {
    %c0_i32 = arith.constant 0 : i32
    %c0_i32_0 = arith.constant 0 : i32
    %c0_i32_1 = arith.constant 0 : i32
    %c0_i32_2 = arith.constant 0 : i32
    return %c0_i32, %c0_i32_0, %c0_i32_1 : i32, i32, i32
  }
  func.func @transform_11(%arg0: i32) -> (i32, i32, i32) {
    %c0_i32 = arith.constant 0 : i32
    %c0_i32_0 = arith.constant 0 : i32
    %c0_i32_1 = arith.constant 0 : i32
    %c0_i32_2 = arith.constant 0 : i32
    return %c0_i32, %c0_i32_0, %c0_i32_1 : i32, i32, i32
  }
  func.func @transform_12(%arg0: i32) -> (i32, i32, i32) {
    %c0_i32 = arith.constant 0 : i32
    %c0_i32_0 = arith.constant 0 : i32
    %c0_i32_1 = arith.constant 0 : i32
    %c0_i32_2 = arith.constant 0 : i32
    return %c0_i32, %c0_i32_0, %c0_i32_1 : i32, i32, i32
  }
  func.func @transform_13(%arg0: i32) -> (i32, i32, i32) {
    %c0_i32 = arith.constant 0 : i32
    %c0_i32_0 = arith.constant 0 : i32
    %c0_i32_1 = arith.constant 0 : i32
    %c0_i32_2 = arith.constant 0 : i32
    return %c0_i32, %c0_i32_0, %c0_i32_1 : i32, i32, i32
  }
  func.func @transform_14(%arg0: i32) -> (i32, i32, i32) {
    %c0_i32 = arith.constant 0 : i32
    %c0_i32_0 = arith.constant 0 : i32
    %c0_i32_1 = arith.constant 0 : i32
    %c0_i32_2 = arith.constant 0 : i32
    return %c0_i32, %c0_i32_0, %c0_i32_1 : i32, i32, i32
  }
  func.func @transform_15(%arg0: i32) -> (i32, i32) {
    %c0_i32 = arith.constant 0 : i32
    %c0_i32_0 = arith.constant 0 : i32
    %c0_i32_1 = arith.constant 0 : i32
    return %c0_i32, %c0_i32_0 : i32, i32
  }
  func.func @transform_16(%arg0: i32) -> (i32, i32) {
    %c0_i32 = arith.constant 0 : i32
    %c0_i32_0 = arith.constant 0 : i32
    %c0_i32_1 = arith.constant 0 : i32
    return %c0_i32, %c0_i32_0 : i32, i32
  }
  func.func @transform_17(%arg0: i32) -> (i32, i32, i32) {
    %c0_i32 = arith.constant 0 : i32
    %c0_i32_0 = arith.constant 0 : i32
    %c0_i32_1 = arith.constant 0 : i32
    return %arg0, %c0_i32, %c0_i32_0 : i32, i32, i32
  }
}

</mosaic_0001>

<llo_original>
// kernel: _lambda_.1
$region0: #{_lambda_.1}
  #allocation0 [shape = 'u32[]', space=smem, size = 0x4, offset = 0x4, fixed_abs, tag = 'smem constant byte address 0x4 - core index']
  #allocation1 [shape = 'u32[144,128]{1,0:T(1,128)}', space=vmem, size = 0x12000, scoped, tag = 'internal scratch']
  %s0 = inlined_call_operand.vmem [shape: bf16[2,12,42], index: 0, kind: input, shape index: {}]
  %s1 = inlined_call_operand.vmem [shape: bf16[42,32], index: 1, kind: input, shape index: {}]
  %s2 = inlined_call_operand.vmem [shape: f32[2,1,32], index: 2, kind: input, shape index: {}]
  %s3 = inlined_call_operand.vmem [shape: f32[2,1,32], index: 3, kind: input, shape index: {}]
  %s4 = inlined_call_operand.vmem [shape: bf16[2,32,96], index: 4, kind: input, shape index: {}]
  %s5 = inlined_call_operand.vmem [shape: f32[2,1,96], index: 5, kind: input, shape index: {}]
  %s6 = inlined_call_operand.vmem [shape: bf16[2,12,8], index: 6, kind: input, shape index: {}]
  %s7 = inlined_call_operand.vmem [shape: bf16[2,32,32], index: 7, kind: input, shape index: {}]
  %s8 = inlined_call_operand.vmem [shape: f32[2,1,32], index: 8, kind: input, shape index: {}]
  %s9 = inlined_call_operand.vmem [shape: f32[2,1,32], index: 9, kind: input, shape index: {}]
  %s10 = inlined_call_operand.vmem [shape: f32[2,1,32], index: 10, kind: input, shape index: {}]
  %s11 = inlined_call_operand.vmem [shape: bf16[2,32,128], index: 11, kind: input, shape index: {}]
  %s12 = inlined_call_operand.vmem [shape: f32[2,1,128], index: 12, kind: input, shape index: {}]
  %s13 = inlined_call_operand.vmem [shape: bf16[2,128,32], index: 13, kind: input, shape index: {}]
  %s14 = inlined_call_operand.vmem [shape: f32[2,1,32], index: 14, kind: input, shape index: {}]
  %s15 = inlined_call_operand.vmem [shape: bf16[32,128], index: 15, kind: input, shape index: {}]
  %s16 = inlined_call_operand.vmem [shape: f32[1,128], index: 16, kind: input, shape index: {}]
  %s17 = inlined_call_operand.vmem [shape: f32[2,12,128], index: 17, kind: output, shape index: {}]
  %s18 = sld [smem:[#allocation0]]
  $region108: #{_lambda_.1} parent=0
    _
  %s20 = ssub.s32 1, %s18
  %s21 = scalar_select 0, %s20, %s18
  loop: start=0, step=1, limit=4
  $region2: #{_lambda_.1} parent=0 // loop_pre_header
    _
  $region3: #{_lambda_.1} parent=0 // loop_header
    %s23 = sphi 0, %s27
    %p24 = scmp.ge.s32.totalorder %s23, 4
    %s33 = sphi 0, %s35
    %s36 = sphi 0, %s33
    %s37 = sphi 0, %s36
    %s53 = sphi 0, %s37
    %s57 = sphi 0, %s57
    %s59 = sphi 0, %s57
    %s60 = sphi 0, %s59
    %s74 = sphi 0, %s60
    %s78 = sphi 0, %s78
    %s80 = sphi 0, %s78
    %s81 = sphi 0, %s80
    %s95 = sphi 0, %s81
    %s99 = sphi 0, %s99
    %s101 = sphi 0, %s99
    %s102 = sphi 0, %s101
    %s116 = sphi 0, %s102
    %s120 = sphi 0, %s120
    %s122 = sphi 0, %s120
    %s123 = sphi 0, %s122
    %s137 = sphi 0, %s123
    %s141 = sphi 0, %s141
    %s143 = sphi 0, %s141
    %s144 = sphi 0, %s143
    %s158 = sphi 0, %s144
    %s162 = sphi 0, %s162
    %s164 = sphi 0, %s162
    %s165 = sphi 0, %s164
    %s179 = sphi 0, %s165
    %s183 = sphi 0, %s183
    %s185 = sphi 0, %s183
    %s186 = sphi 0, %s185
    %s200 = sphi 0, %s186
    %s204 = sphi 0, %s204
    %s206 = sphi 0, %s204
    %s207 = sphi 0, %s206
    %s221 = sphi 0, %s207
    %s225 = sphi 0, %s225
    %s227 = sphi 0, %s225
    %s228 = sphi 0, %s227
    %s242 = sphi 0, %s228
    %s246 = sphi 0, %s246
    %s248 = sphi 0, %s246
    %s249 = sphi 0, %s248
    %s263 = sphi 0, %s249
    %s267 = sphi 0, %s267
    %s269 = sphi 0, %s267
    %s270 = sphi 0, %s269
    %s284 = sphi 0, %s270
    %s288 = sphi 0, %s288
    %s290 = sphi 0, %s288
    %s291 = sphi 0, %s290
    %s305 = sphi 0, %s291
    %s309 = sphi 0, %s309
    %s311 = sphi 0, %s309
    %s312 = sphi 0, %s311
    %s326 = sphi 0, %s312
    %s330 = sphi 0, %s330
    %s332 = sphi 0, %s330
    %s333 = sphi 0, %s332
    %s347 = sphi 0, %s333
    %s351 = sphi 0, %s351
    %s353 = sphi 0, %s351
    %s354 = sphi 0, %s353
    %s368 = sphi 0, %s354
    %s372 = sphi 0, %s372
    %s374 = sphi 0, %s372
    %s375 = sphi 0, %s374
    %s389 = sphi 0, %s375
    %s395 = sphi 0, %s397
    %s398 = sphi 0, %s395
    %s399 = sphi 0, %s398
    %s415 = sphi 0, %s399
  $region4: #{_lambda_.1} parent=0 // loop_header_branch
    %26 = sbr.rel (%p24) target = $region8
  $region5: #{_lambda_.1} parent=0 // loop_body
    %s28 = ssub.s32 %s23, 1
    %s29 = ssub.s32 %s23, 2
    %s30 = sadd.s32 %s23, 1
    %s31 = ssub.s32 %s23, %s30
    %p32 = scmp.eq.s32.totalorder %s31, 0
    %s34 = sadd.s32 %s33, 1
    %s35 = scalar_select %p32, %s33, %s34
    %p38 = pneg %p32
    %p39 = scmp.eq.s32.totalorder %s23, 1
    %p40 = por %p38, %p39
    %p41 = scmp.ne.s32.totalorder %s33, %s36
    %p42 = scmp.eq.s32.totalorder %s23, 0
    %p43 = por %p41, %p42
    %p44 = scmp.ne.s32.totalorder %s33, %s36
    %p45 = scmp.eq.s32.totalorder %s28, 1
    %p46 = por %p44, %p45
    %p47 = scmp.ne.s32.totalorder %s36, %s37
    %p48 = scmp.eq.s32.totalorder %s28, 0
    %p49 = por %p47, %p48
    %p50 = scmp.ne.s32.totalorder %s36, %s37
    %p51 = scmp.eq.s32.totalorder %s29, 1
    %p52 = por %p50, %p51
    %p54 = scmp.ne.s32.totalorder %s37, %s53
    %p55 = scmp.eq.s32.totalorder %s29, 0
    %p56 = por %p54, %p55
    %s58 = sadd.s32 %s57, 1
    %p61 = scmp.eq.s32.totalorder %s23, 1
    %p62 = scmp.ne.s32.totalorder %s57, %s59
    %p63 = scmp.eq.s32.totalorder %s23, 0
    %p64 = por %p62, %p63
    %p65 = scmp.ne.s32.totalorder %s57, %s59
    %p66 = scmp.eq.s32.totalorder %s28, 1
    %p67 = por %p65, %p66
    %p68 = scmp.ne.s32.totalorder %s59, %s60
    %p69 = scmp.eq.s32.totalorder %s28, 0
    %p70 = por %p68, %p69
    %p71 = scmp.ne.s32.totalorder %s59, %s60
    %p72 = scmp.eq.s32.totalorder %s29, 1
    %p73 = por %p71, %p72
    %p75 = scmp.ne.s32.totalorder %s60, %s74
    %p76 = scmp.eq.s32.totalorder %s29, 0
    %p77 = por %p75, %p76
    %s79 = sadd.s32 %s78, 1
    %p82 = scmp.eq.s32.totalorder %s23, 1
    %p83 = scmp.ne.s32.totalorder %s78, %s80
    %p84 = scmp.eq.s32.totalorder %s23, 0
    %p85 = por %p83, %p84
    %p86 = scmp.ne.s32.totalorder %s78, %s80
    %p87 = scmp.eq.s32.totalorder %s28, 1
    %p88 = por %p86, %p87
    %p89 = scmp.ne.s32.totalorder %s80, %s81
    %p90 = scmp.eq.s32.totalorder %s28, 0
    %p91 = por %p89, %p90
    %p92 = scmp.ne.s32.totalorder %s80, %s81
    %p93 = scmp.eq.s32.totalorder %s29, 1
    %p94 = por %p92, %p93
    %p96 = scmp.ne.s32.totalorder %s81, %s95
    %p97 = scmp.eq.s32.totalorder %s29, 0
    %p98 = por %p96, %p97
    %s100 = sadd.s32 %s99, 1
    %p103 = scmp.eq.s32.totalorder %s23, 1
    %p104 = scmp.ne.s32.totalorder %s99, %s101
    %p105 = scmp.eq.s32.totalorder %s23, 0
    %p106 = por %p104, %p105
    %p107 = scmp.ne.s32.totalorder %s99, %s101
    %p108 = scmp.eq.s32.totalorder %s28, 1
    %p109 = por %p107, %p108
    %p110 = scmp.ne.s32.totalorder %s101, %s102
    %p111 = scmp.eq.s32.totalorder %s28, 0
    %p112 = por %p110, %p111
    %p113 = scmp.ne.s32.totalorder %s101, %s102
    %p114 = scmp.eq.s32.totalorder %s29, 1
    %p115 = por %p113, %p114
    %p117 = scmp.ne.s32.totalorder %s102, %s116
    %p118 = scmp.eq.s32.totalorder %s29, 0
    %p119 = por %p117, %p118
    %s121 = sadd.s32 %s120, 1
    %p124 = scmp.eq.s32.totalorder %s23, 1
    %p125 = scmp.ne.s32.totalorder %s120, %s122
    %p126 = scmp.eq.s32.totalorder %s23, 0
    %p127 = por %p125, %p126
    %p128 = scmp.ne.s32.totalorder %s120, %s122
    %p129 = scmp.eq.s32.totalorder %s28, 1
    %p130 = por %p128, %p129
    %p131 = scmp.ne.s32.totalorder %s122, %s123
    %p132 = scmp.eq.s32.totalorder %s28, 0
    %p133 = por %p131, %p132
    %p134 = scmp.ne.s32.totalorder %s122, %s123
    %p135 = scmp.eq.s32.totalorder %s29, 1
    %p136 = por %p134, %p135
    %p138 = scmp.ne.s32.totalorder %s123, %s137
    %p139 = scmp.eq.s32.totalorder %s29, 0
    %p140 = por %p138, %p139
    %s142 = sadd.s32 %s141, 1
    %p145 = scmp.eq.s32.totalorder %s23, 1
    %p146 = scmp.ne.s32.totalorder %s141, %s143
    %p147 = scmp.eq.s32.totalorder %s23, 0
    %p148 = por %p146, %p147
    %p149 = scmp.ne.s32.totalorder %s141, %s143
    %p150 = scmp.eq.s32.totalorder %s28, 1
    %p151 = por %p149, %p150
    %p152 = scmp.ne.s32.totalorder %s143, %s144
    %p153 = scmp.eq.s32.totalorder %s28, 0
    %p154 = por %p152, %p153
    %p155 = scmp.ne.s32.totalorder %s143, %s144
    %p156 = scmp.eq.s32.totalorder %s29, 1
    %p157 = por %p155, %p156
    %p159 = scmp.ne.s32.totalorder %s144, %s158
    %p160 = scmp.eq.s32.totalorder %s29, 0
    %p161 = por %p159, %p160
    %s163 = sadd.s32 %s162, 1
    %p166 = scmp.eq.s32.totalorder %s23, 1
    %p167 = scmp.ne.s32.totalorder %s162, %s164
    %p168 = scmp.eq.s32.totalorder %s23, 0
    %p169 = por %p167, %p168
    %p170 = scmp.ne.s32.totalorder %s162, %s164
    %p171 = scmp.eq.s32.totalorder %s28, 1
    %p172 = por %p170, %p171
    %p173 = scmp.ne.s32.totalorder %s164, %s165
    %p174 = scmp.eq.s32.totalorder %s28, 0
    %p175 = por %p173, %p174
    %p176 = scmp.ne.s32.totalorder %s164, %s165
    %p177 = scmp.eq.s32.totalorder %s29, 1
    %p178 = por %p176, %p177
    %p180 = scmp.ne.s32.totalorder %s165, %s179
    %p181 = scmp.eq.s32.totalorder %s29, 0
    %p182 = por %p180, %p181
    %s184 = sadd.s32 %s183, 1
    %p187 = scmp.eq.s32.totalorder %s23, 1
    %p188 = scmp.ne.s32.totalorder %s183, %s185
    %p189 = scmp.eq.s32.totalorder %s23, 0
    %p190 = por %p188, %p189
    %p191 = scmp.ne.s32.totalorder %s183, %s185
    %p192 = scmp.eq.s32.totalorder %s28, 1
    %p193 = por %p191, %p192
    %p194 = scmp.ne.s32.totalorder %s185, %s186
    %p195 = scmp.eq.s32.totalorder %s28, 0
    %p196 = por %p194, %p195
    %p197 = scmp.ne.s32.totalorder %s185, %s186
    %p198 = scmp.eq.s32.totalorder %s29, 1
    %p199 = por %p197, %p198
    %p201 = scmp.ne.s32.totalorder %s186, %s200
    %p202 = scmp.eq.s32.totalorder %s29, 0
    %p203 = por %p201, %p202
    %s205 = sadd.s32 %s204, 1
    %p208 = scmp.eq.s32.totalorder %s23, 1
    %p209 = scmp.ne.s32.totalorder %s204, %s206
    %p210 = scmp.eq.s32.totalorder %s23, 0
    %p211 = por %p209, %p210
    %p212 = scmp.ne.s32.totalorder %s204, %s206
    %p213 = scmp.eq.s32.totalorder %s28, 1
    %p214 = por %p212, %p213
    %p215 = scmp.ne.s32.totalorder %s206, %s207
    %p216 = scmp.eq.s32.totalorder %s28, 0
    %p217 = por %p215, %p216
    %p218 = scmp.ne.s32.totalorder %s206, %s207
    %p219 = scmp.eq.s32.totalorder %s29, 1
    %p220 = por %p218, %p219
    %p222 = scmp.ne.s32.totalorder %s207, %s221
    %p223 = scmp.eq.s32.totalorder %s29, 0
    %p224 = por %p222, %p223
    %s226 = sadd.s32 %s225, 1
    %p229 = scmp.eq.s32.totalorder %s23, 1
    %p230 = scmp.ne.s32.totalorder %s225, %s227
    %p231 = scmp.eq.s32.totalorder %s23, 0
    %p232 = por %p230, %p231
    %p233 = scmp.ne.s32.totalorder %s225, %s227
    %p234 = scmp.eq.s32.totalorder %s28, 1
    %p235 = por %p233, %p234
    %p236 = scmp.ne.s32.totalorder %s227, %s228
    %p237 = scmp.eq.s32.totalorder %s28, 0
    %p238 = por %p236, %p237
    %p239 = scmp.ne.s32.totalorder %s227, %s228
    %p240 = scmp.eq.s32.totalorder %s29, 1
    %p241 = por %p239, %p240
    %p243 = scmp.ne.s32.totalorder %s228, %s242
    %p244 = scmp.eq.s32.totalorder %s29, 0
    %p245 = por %p243, %p244
    %s247 = sadd.s32 %s246, 1
    %p250 = scmp.eq.s32.totalorder %s23, 1
    %p251 = scmp.ne.s32.totalorder %s246, %s248
    %p252 = scmp.eq.s32.totalorder %s23, 0
    %p253 = por %p251, %p252
    %p254 = scmp.ne.s32.totalorder %s246, %s248
    %p255 = scmp.eq.s32.totalorder %s28, 1
    %p256 = por %p254, %p255
    %p257 = scmp.ne.s32.totalorder %s248, %s249
    %p258 = scmp.eq.s32.totalorder %s28, 0
    %p259 = por %p257, %p258
    %p260 = scmp.ne.s32.totalorder %s248, %s249
    %p261 = scmp.eq.s32.totalorder %s29, 1
    %p262 = por %p260, %p261
    %p264 = scmp.ne.s32.totalorder %s249, %s263
    %p265 = scmp.eq.s32.totalorder %s29, 0
    %p266 = por %p264, %p265
    %s268 = sadd.s32 %s267, 1
    %p271 = scmp.eq.s32.totalorder %s23, 1
    %p272 = scmp.ne.s32.totalorder %s267, %s269
    %p273 = scmp.eq.s32.totalorder %s23, 0
    %p274 = por %p272, %p273
    %p275 = scmp.ne.s32.totalorder %s267, %s269
    %p276 = scmp.eq.s32.totalorder %s28, 1
    %p277 = por %p275, %p276
    %p278 = scmp.ne.s32.totalorder %s269, %s270
    %p279 = scmp.eq.s32.totalorder %s28, 0
    %p280 = por %p278, %p279
    %p281 = scmp.ne.s32.totalorder %s269, %s270
    %p282 = scmp.eq.s32.totalorder %s29, 1
    %p283 = por %p281, %p282
    %p285 = scmp.ne.s32.totalorder %s270, %s284
    %p286 = scmp.eq.s32.totalorder %s29, 0
    %p287 = por %p285, %p286
    %s289 = sadd.s32 %s288, 1
    %p292 = scmp.eq.s32.totalorder %s23, 1
    %p293 = scmp.ne.s32.totalorder %s288, %s290
    %p294 = scmp.eq.s32.totalorder %s23, 0
    %p295 = por %p293, %p294
    %p296 = scmp.ne.s32.totalorder %s288, %s290
    %p297 = scmp.eq.s32.totalorder %s28, 1
    %p298 = por %p296, %p297
    %p299 = scmp.ne.s32.totalorder %s290, %s291
    %p300 = scmp.eq.s32.totalorder %s28, 0
    %p301 = por %p299, %p300
    %p302 = scmp.ne.s32.totalorder %s290, %s291
    %p303 = scmp.eq.s32.totalorder %s29, 1
    %p304 = por %p302, %p303
    %p306 = scmp.ne.s32.totalorder %s291, %s305
    %p307 = scmp.eq.s32.totalorder %s29, 0
    %p308 = por %p306, %p307
    %s310 = sadd.s32 %s309, 1
    %p313 = scmp.eq.s32.totalorder %s23, 1
    %p314 = scmp.ne.s32.totalorder %s309, %s311
    %p315 = scmp.eq.s32.totalorder %s23, 0
    %p316 = por %p314, %p315
    %p317 = scmp.ne.s32.totalorder %s309, %s311
    %p318 = scmp.eq.s32.totalorder %s28, 1
    %p319 = por %p317, %p318
    %p320 = scmp.ne.s32.totalorder %s311, %s312
    %p321 = scmp.eq.s32.totalorder %s28, 0
    %p322 = por %p320, %p321
    %p323 = scmp.ne.s32.totalorder %s311, %s312
    %p324 = scmp.eq.s32.totalorder %s29, 1
    %p325 = por %p323, %p324
    %p327 = scmp.ne.s32.totalorder %s312, %s326
    %p328 = scmp.eq.s32.totalorder %s29, 0
    %p329 = por %p327, %p328
    %s331 = sadd.s32 %s330, 1
    %p334 = scmp.eq.s32.totalorder %s23, 1
    %p335 = scmp.ne.s32.totalorder %s330, %s332
    %p336 = scmp.eq.s32.totalorder %s23, 0
    %p337 = por %p335, %p336
    %p338 = scmp.ne.s32.totalorder %s330, %s332
    %p339 = scmp.eq.s32.totalorder %s28, 1
    %p340 = por %p338, %p339
    %p341 = scmp.ne.s32.totalorder %s332, %s333
    %p342 = scmp.eq.s32.totalorder %s28, 0
    %p343 = por %p341, %p342
    %p344 = scmp.ne.s32.totalorder %s332, %s333
    %p345 = scmp.eq.s32.totalorder %s29, 1
    %p346 = por %p344, %p345
    %p348 = scmp.ne.s32.totalorder %s333, %s347
    %p349 = scmp.eq.s32.totalorder %s29, 0
    %p350 = por %p348, %p349
    %s352 = sadd.s32 %s351, 1
    %p355 = scmp.eq.s32.totalorder %s23, 1
    %p356 = scmp.ne.s32.totalorder %s351, %s353
    %p357 = scmp.eq.s32.totalorder %s23, 0
    %p358 = por %p356, %p357
    %p359 = scmp.ne.s32.totalorder %s351, %s353
    %p360 = scmp.eq.s32.totalorder %s28, 1
    %p361 = por %p359, %p360
    %p362 = scmp.ne.s32.totalorder %s353, %s354
    %p363 = scmp.eq.s32.totalorder %s28, 0
    %p364 = por %p362, %p363
    %p365 = scmp.ne.s32.totalorder %s353, %s354
    %p366 = scmp.eq.s32.totalorder %s29, 1
    %p367 = por %p365, %p366
    %p369 = scmp.ne.s32.totalorder %s354, %s368
    %p370 = scmp.eq.s32.totalorder %s29, 0
    %p371 = por %p369, %p370
    %s373 = sadd.s32 %s372, 1
    %p376 = scmp.eq.s32.totalorder %s23, 1
    %p377 = scmp.ne.s32.totalorder %s372, %s374
    %p378 = scmp.eq.s32.totalorder %s23, 0
    %p379 = por %p377, %p378
    %p380 = scmp.ne.s32.totalorder %s372, %s374
    %p381 = scmp.eq.s32.totalorder %s28, 1
    %p382 = por %p380, %p381
    %p383 = scmp.ne.s32.totalorder %s374, %s375
    %p384 = scmp.eq.s32.totalorder %s28, 0
    %p385 = por %p383, %p384
    %p386 = scmp.ne.s32.totalorder %s374, %s375
    %p387 = scmp.eq.s32.totalorder %s29, 1
    %p388 = por %p386, %p387
    %p390 = scmp.ne.s32.totalorder %s375, %s389
    %p391 = scmp.eq.s32.totalorder %s29, 0
    %p392 = por %p390, %p391
    %s393 = ssub.s32 %s23, %s30
    %p394 = scmp.eq.s32.totalorder %s393, 0
    %s396 = sadd.s32 %s395, 1
    %s397 = scalar_select %p394, %s395, %s396
    %p400 = pneg %p394
    %p401 = scmp.eq.s32.totalorder %s23, 1
    %p402 = por %p400, %p401
    %p403 = scmp.ne.s32.totalorder %s395, %s398
    %p404 = scmp.eq.s32.totalorder %s23, 0
    %p405 = por %p403, %p404
    %p406 = scmp.ne.s32.totalorder %s395, %s398
    %p407 = scmp.eq.s32.totalorder %s28, 1
    %p408 = por %p406, %p407
    %p409 = scmp.ne.s32.totalorder %s398, %s399
    %p410 = scmp.eq.s32.totalorder %s28, 0
    %p411 = por %p409, %p410
    %p412 = scmp.ne.s32.totalorder %s398, %s399
    %p413 = scmp.eq.s32.totalorder %s29, 1
    %p414 = por %p412, %p413
    %p416 = scmp.ne.s32.totalorder %s399, %s415
    %p417 = scmp.eq.s32.totalorder %s29, 0
    %p418 = por %p416, %p417
    %p419 = scmp.le.s32.totalorder 1, %s23
    %p420 = scmp.lt.s32.totalorder %s23, 3
    %p421 = pnand %p419, %p420
    %p422 = pneg %p421
    // Predicated region
    $region9: #{_lambda_.1} parent=5 // pred_check
      _
    $region10: #{_lambda_.1} parent=5 // pred_check_branch
      %424 = sbr.rel (%p421) target = $region12
    $region11: #{_lambda_.1} parent=5 // pred_region
      %s425 = ssub.s32 %s23, 1
      // Predicated region
      $region13: #{_lambda_.1} parent=11 // pred_check
        %p426 = pneg %p70
      $region14: #{_lambda_.1} parent=11 // pred_check_branch
        %428 = sbr.rel (%p426) target = $region16
      $region15: #{_lambda_.1} parent=11 // pred_region
        _
      $region16: #{_lambda_.1} parent=11 // pred_fallthru
        _
      // Predicated region
      $region17: #{_lambda_.1} parent=11 // pred_check
        %p429 = pneg %p91
      $region18: #{_lambda_.1} parent=11 // pred_check_branch
        %431 = sbr.rel (%p429) target = $region20
      $region19: #{_lambda_.1} parent=11 // pred_region
        _
      $region20: #{_lambda_.1} parent=11 // pred_fallthru
        _
      // Predicated region
      $region21: #{_lambda_.1} parent=11 // pred_check
        %p432 = pneg %p112
      $region22: #{_lambda_.1} parent=11 // pred_check_branch
        %434 = sbr.rel (%p432) target = $region24
      $region23: #{_lambda_.1} parent=11 // pred_region
        _
      $region24: #{_lambda_.1} parent=11 // pred_fallthru
        _
      // Predicated region
      $region25: #{_lambda_.1} parent=11 // pred_check
        %p435 = pneg %p133
      $region26: #{_lambda_.1} parent=11 // pred_check_branch
        %437 = sbr.rel (%p435) target = $region28
      $region27: #{_lambda_.1} parent=11 // pred_region
        _
      $region28: #{_lambda_.1} parent=11 // pred_fallthru
        _
      // Predicated region
      $region29: #{_lambda_.1} parent=11 // pred_check
        %p438 = pneg %p154
      $region30: #{_lambda_.1} parent=11 // pred_check_branch
        %440 = sbr.rel (%p438) target = $region32
      $region31: #{_lambda_.1} parent=11 // pred_region
        _
      $region32: #{_lambda_.1} parent=11 // pred_fallthru
        _
      // Predicated region
      $region33: #{_lambda_.1} parent=11 // pred_check
        %p441 = pneg %p175
      $region34: #{_lambda_.1} parent=11 // pred_check_branch
        %443 = sbr.rel (%p441) target = $region36
      $region35: #{_lambda_.1} parent=11 // pred_region
        _
      $region36: #{_lambda_.1} parent=11 // pred_fallthru
        _
      // Predicated region
      $region37: #{_lambda_.1} parent=11 // pred_check
        %p444 = pneg %p196
      $region38: #{_lambda_.1} parent=11 // pred_check_branch
        %446 = sbr.rel (%p444) target = $region40
      $region39: #{_lambda_.1} parent=11 // pred_region
        _
      $region40: #{_lambda_.1} parent=11 // pred_fallthru
        _
      // Predicated region
      $region41: #{_lambda_.1} parent=11 // pred_check
        %p447 = pneg %p217
      $region42: #{_lambda_.1} parent=11 // pred_check_branch
        %449 = sbr.rel (%p447) target = $region44
      $region43: #{_lambda_.1} parent=11 // pred_region
        _
      $region44: #{_lambda_.1} parent=11 // pred_fallthru
        _
      // Predicated region
      $region45: #{_lambda_.1} parent=11 // pred_check
        %p450 = pneg %p238
      $region46: #{_lambda_.1} parent=11 // pred_check_branch
        %452 = sbr.rel (%p450) target = $region48
      $region47: #{_lambda_.1} parent=11 // pred_region
        _
      $region48: #{_lambda_.1} parent=11 // pred_fallthru
        _
      // Predicated region
      $region49: #{_lambda_.1} parent=11 // pred_check
        %p453 = pneg %p259
      $region50: #{_lambda_.1} parent=11 // pred_check_branch
        %455 = sbr.rel (%p453) target = $region52
      $region51: #{_lambda_.1} parent=11 // pred_region
        _
      $region52: #{_lambda_.1} parent=11 // pred_fallthru
        _
      // Predicated region
      $region53: #{_lambda_.1} parent=11 // pred_check
        %p456 = pneg %p280
      $region54: #{_lambda_.1} parent=11 // pred_check_branch
        %458 = sbr.rel (%p456) target = $region56
      $region55: #{_lambda_.1} parent=11 // pred_region
        _
      $region56: #{_lambda_.1} parent=11 // pred_fallthru
        _
      // Predicated region
      $region57: #{_lambda_.1} parent=11 // pred_check
        %p459 = pneg %p301
      $region58: #{_lambda_.1} parent=11 // pred_check_branch
        %461 = sbr.rel (%p459) target = $region60
      $region59: #{_lambda_.1} parent=11 // pred_region
        _
      $region60: #{_lambda_.1} parent=11 // pred_fallthru
        _
      // Predicated region
      $region61: #{_lambda_.1} parent=11 // pred_check
        %p462 = pneg %p322
      $region62: #{_lambda_.1} parent=11 // pred_check_branch
        %464 = sbr.rel (%p462) target = $region64
      $region63: #{_lambda_.1} parent=11 // pred_region
        _
      $region64: #{_lambda_.1} parent=11 // pred_fallthru
        _
      // Predicated region
      $region65: #{_lambda_.1} parent=11 // pred_check
        %p465 = pneg %p343
      $region66: #{_lambda_.1} parent=11 // pred_check_branch
        %467 = sbr.rel (%p465) target = $region68
      $region67: #{_lambda_.1} parent=11 // pred_region
        _
      $region68: #{_lambda_.1} parent=11 // pred_fallthru
        _
      // Predicated region
      $region69: #{_lambda_.1} parent=11 // pred_check
        %p468 = pneg %p364
      $region70: #{_lambda_.1} parent=11 // pred_check_branch
        %470 = sbr.rel (%p468) target = $region72
      $region71: #{_lambda_.1} parent=11 // pred_region
        _
      $region72: #{_lambda_.1} parent=11 // pred_fallthru
        _
      // Predicated region
      $region73: #{_lambda_.1} parent=11 // pred_check
        %p471 = pneg %p385
      $region74: #{_lambda_.1} parent=11 // pred_check_branch
        %473 = sbr.rel (%p471) target = $region76
      $region75: #{_lambda_.1} parent=11 // pred_region
        _
      $region76: #{_lambda_.1} parent=11 // pred_fallthru
        _
    $region12: #{_lambda_.1} parent=5 // pred_fallthru
      _
    %p474 = scmp.lt.s32.totalorder %s23, 2
    // Predicated region
    $region77: #{_lambda_.1} parent=5 // pred_check
      %p475 = pneg %p474
    $region78: #{_lambda_.1} parent=5 // pred_check_branch
      %477 = sbr.rel (%p475) target = $region80
    $region79: #{_lambda_.1} parent=5 // pred_region
      // Predicated region
      $region81: #{_lambda_.1} parent=79 // pred_check
        %p478 = pneg %p43
      $region82: #{_lambda_.1} parent=79 // pred_check_branch
        %480 = sbr.rel (%p478) target = $region84
      $region83: #{_lambda_.1} parent=79 // pred_region
        %p481 = scmp.lt.s32.totalorder %s23, 1
        %s482 = scalar_select %p481, %s23, 1
        %s483 = smul.addr %s482, 2
        %s484 = smul.addr %s483, 4
        %s485 = scalar_lea.vmem %s0, %s484
      $region84: #{_lambda_.1} parent=79 // pred_fallthru
        _
    $region80: #{_lambda_.1} parent=5 // pred_fallthru
      _
    %p486 = scmp.le.s32.totalorder 1, %s23
    %p487 = scmp.lt.s32.totalorder %s23, 3
    %p488 = pnand %p486, %p487
    %p489 = pneg %p488
    // Predicated region
    $region85: #{_lambda_.1} parent=5 // pred_check
      _
    $region86: #{_lambda_.1} parent=5 // pred_check_branch
      %491 = sbr.rel (%p488) target = $region88
    $region87: #{_lambda_.1} parent=5 // pred_region
      %s492 = ssub.s32 %s23, 1
      %p493 = scmp.lt.s32.totalorder %s28, 1
      %s494 = scalar_select %p493, %s28, 1
      %s495 = smul.addr %s494, 2
      %s496 = smul.addr %s495, 4
      %s497 = scalar_lea.vmem %s0, %s496
      %p498 = pneg %p49
      %p499 = pneg %p46
      %p500 = pneg %p70
      %p501 = pneg %p67
      %p502 = pneg %p91
      %p503 = pneg %p88
      %p504 = pneg %p112
      %p505 = pneg %p109
      %p506 = pneg %p133
      %p507 = pneg %p130
      %p508 = pneg %p154
      %p509 = pneg %p151
      %p510 = pneg %p175
      %p511 = pneg %p172
      %p512 = pneg %p196
      %p513 = pneg %p193
      %p514 = pneg %p217
      %p515 = pneg %p214
      %p516 = pneg %p238
      %p517 = pneg %p235
      %p518 = pneg %p259
      %p519 = pneg %p256
      %p520 = pneg %p280
      %p521 = pneg %p277
      %p522 = pneg %p301
      %p523 = pneg %p298
      %p524 = pneg %p322
      %p525 = pneg %p319
      %p526 = pneg %p343
      %p527 = pneg %p340
      %p528 = pneg %p364
      %p529 = pneg %p361
      %p530 = pneg %p385
      %p531 = pneg %p382
      %p532 = pneg %p411
      %p533 = pneg %p408
      %p534 = scmp.lt.s32.totalorder %s28, 1
      %s535 = scalar_select %p534, %s28, 1
      %s536 = smul.addr %s535, 2
      %s537 = smul.addr %s536, 8
      %s538 = scalar_lea.vmem %s17, %s537
      %p539 = scmp.lt.s32.totalorder %s28, 1
      %s540 = scalar_select %p539, %s28, 1
      %s541 = smul.addr %s540, 2
      %s542 = smul.addr %s541, 4
      %s543 = scalar_lea.vmem %s0, %s542
      %p544 = scmp.lt.s32.totalorder %s28, 1
      %s545 = scalar_select %p544, %s28, 1
      %s546 = smul.addr %s545, 2
      %s547 = smul.addr %s546, 8
      %s548 = scalar_lea.vmem %s17, %s547
      %v550 = vlaneseq
      %v551 = vshrl.u32 %v550, 7
      %v552 = vadd.s32 %v551, 8
      %v553 = vlaneseq
      %v554 = vand.u32 %v553, 127
      %vm555 = vcmp.le.s32.totalorder %v554, %v551
      %vm556 = vcmp.le.s32.totalorder %v554, %v552
      %v557 = vsel %vm555, 0.0, -1e+30
      %v558 = vsel %vm556, 0.0, -1e+30
      %v559 = vsub.s32 11, %v551
      %v560 = vsub.s32 11, %v552
      %v561 = vand.u32 %v559, 1
      %v562 = vand.u32 %v560, 1
      %vm563 = vcmp.eq.s32.totalorder %v561, 1
      %vm564 = vcmp.eq.s32.totalorder %v562, 1
      %v565 = vshra.s32 %v559, 1
      %v566 = vshra.s32 %v560, 1
      %v567 = vand.u32 %v565, 1
      %v568 = vand.u32 %v566, 1
      %vm569 = vcmp.eq.s32.totalorder %v567, 1
      %vm570 = vcmp.eq.s32.totalorder %v568, 1
      %v571 = vshra.s32 %v559, 2
      %v572 = vshra.s32 %v560, 2
      %v573 = vand.u32 %v571, 1
      %v574 = vand.u32 %v572, 1
      %vm575 = vcmp.eq.s32.totalorder %v573, 1
      %vm576 = vcmp.eq.s32.totalorder %v574, 1
      %v577 = vshra.s32 %v559, 3
      %v578 = vshra.s32 %v560, 3
      %v579 = vand.u32 %v577, 1
      %v580 = vand.u32 %v578, 1
      %vm581 = vcmp.eq.s32.totalorder %v579, 1
      %vm582 = vcmp.eq.s32.totalorder %v580, 1
      %v583 = vld [vmem:[%s543] sm:$0xf]
      %v584 = vld [vmem:[%s543 + $0x4] sm:$0x3]
      %v585 = vld [vmem:[%s1] sm:$0xf]
      %v586 = vld [vmem:[%s1 + $0x4] sm:$0xf]
      %v587 = vld [vmem:[%s1 + $0x8] sm:$0xf]
      %v588 = vld [vmem:[%s1 + $0xc] sm:$0xf]
      %v589 = vld [vmem:[%s1 + $0x10] sm:$0xf]
      %v590 = vld [vmem:[%s1 + $0x14] sm:$0x1]
      %v593 = vunpack.c.l.b16 %v583
      %v594 = vunpack.c.l.b16 %v584
      %v595 = vpack.c.b16 %v594, %v593
      %v602 = vunpack.c.l.b16 %v585
      %v603 = vunpack.c.l.b16 %v586
      %v604 = vunpack.c.l.b16 %v587
      %v605 = vunpack.c.l.b16 %v588
      %v606 = vunpack.c.l.b16 %v589
      %v607 = vunpack.c.l.b16 %v590
      %v608 = vpack.c.b16 %v603, %v602
      %v609 = vpack.c.b16 %v605, %v604
      %v610 = vpack.c.b16 %v607, %v606
      %vm613 = vcmask 343040
      %v615 = vsel %vm613, %v595, 0
      %vm617 = vcmask 1044480
      %v619 = vsel %vm617, %v610, 0
      %621 = vmatprep.subr.bf16.mxu0 0
      %622 = vmatpush1.bf16.msra.mxu0 0
      %623 = vmatprep.subr.bf16.mxu0 0
      %624 = vmatpush1.bf16.msra.mxu0 0
      %625 = vmatprep.subr.bf16.mxu0 0
      %626 = vmatpush1.bf16.msra.mxu0 0
      %627 = vmatprep.subr.bf16.mxu0 0
      %628 = vmatpush1.bf16.msra.mxu0 0
      %629 = vmatprep.subr.bf16.mxu0 0
      %630 = vmatpush1.bf16.msra.mxu0 0
      %631 = vmatprep.subr.bf16.mxu0 0
      %632 = vmatpush1.bf16.msra.mxu0 %v619
      %633 = vmatprep.subr.bf16.mxu0 0
      %634 = vmatpush1.bf16.msra.mxu0 %v609
      %635 = vmatprep.subr.bf16.mxu0 0
      %636 = vmatpush1.bf16.msra.mxu0 %v608
      %637 = vmatprep.subr.bf16.mxu0 0
      %638 = vmatpush2.bf16.msra.mxu0 0
      %639 = vmatprep.subr.bf16.mxu0 0
      %640 = vmatpush2.bf16.msra.mxu0 0
      %641 = vmatprep.subr.bf16.mxu0 0
      %642 = vmatpush2.bf16.msra.mxu0 0
      %643 = vmatprep.subr.bf16.mxu0 0
      %644 = vmatpush2.bf16.msra.mxu0 0
      %645 = vmatprep.subr.bf16.mxu0 0
      %646 = vmatpush2.bf16.msra.mxu0 0
      %647 = vmatprep.subr.bf16.mxu0 0
      %648 = vmatpush2.bf16.msra.mxu0 0
      %649 = vmatprep.subr.bf16.mxu0 0
      %650 = vmatpush2.bf16.msra.mxu0 0
      %651 = vmatprep.subr.bf16.mxu0 0
      %652 = vmatpush2.bf16.msra.mxu0 0
      %653 = vmatprep.mubr.bf16.mxu0 0
      %654 = vmatmul.mubr.bf16.gmra.mxu0 %v615
      %v655 = vpop.f32.mrf.mxu0
      %v656 = vadd.f32 0.0, %v655
      %v657 = vpop.f32.mrf.mxu0
      %v658 = vpop.f32.mrf.mxu0
      %v659 = vadd.f32 0.0, %v658
      %v660 = vpop.f32.mrf.mxu0
      %661 = vdwg.mxu0
      loop: start=0, step=1, limit=2
      $region89: #{_lambda_.1} parent=87 // loop_pre_header
        _
      $region90: #{_lambda_.1} parent=87 // loop_header
        %s663 = sphi 0, %s667
        %p664 = scmp.ge.s32.totalorder %s663, 2
        %v668 = vphi %v656, %v2124
        %v669 = vphi %v659, %v2125
      $region91: #{_lambda_.1} parent=87 // loop_header_branch
        %666 = sbr.rel (%p664) target = $region95
      $region92: #{_lambda_.1} parent=87 // loop_body
        %s670 = scalar_lea.vmem %s2, %s663
        %v671 = vld [vmem:[%s670] sm:$0x1]
        %s672 = scalar_lea.vmem %s3, %s663
        %v673 = vld [vmem:[%s672] sm:$0x1]
        %vm674 = vcmask 261120
        %v675 = vsel %vm674, %v668, 0.0
        %676 = vadd.xlane.f32.xlu0 %v675
        %v677 = vpop.xlane.xlu0 %676
        %vm678 = vcmask 257024
        %v679 = vsel %vm678, %v669, 0.0
        %680 = vadd.xlane.f32.xlu0 %v679
        %v681 = vpop.xlane.xlu0 %680
        %v682 = vrcp.pop 32.0
        %v683 = vmul.f32 %v677, %v682
        %v684 = vmul.f32 %v681, %v682
        %v685 = vsub.f32 %v668, %v683
        %v686 = vsub.f32 %v669, %v684
        %v687 = vmul.f32 %v685, %v685
        %v688 = vmul.f32 %v686, %v686
        %v689 = vsel %vm674, %v687, 0.0
        %690 = vadd.xlane.f32.xlu0 %v689
        %v691 = vpop.xlane.xlu0 %690
        %v692 = vsel %vm678, %v688, 0.0
        %693 = vadd.xlane.f32.xlu0 %v692
        %v694 = vpop.xlane.xlu0 %693
        %v695 = vmul.f32 %v691, %v682
        %v696 = vmul.f32 %v694, %v682
        %v697 = vadd.f32 %v695, 1e-05
        %v698 = vadd.f32 %v696, 1e-05
        %v699 = vrsqrt.pop %v697
        %v700 = vrsqrt.pop %v698
        %v701 = vmul.f32 %v685, %v699
        %v702 = vmul.f32 %v686, %v700
        %v704 = vlaneseq
        %v705 = vshrl.u32 %v704, 7
        %v706 = vsub.s32 0, %v705
        %v707 = vrot.slane %v671, %v706
        %v709 = vmul.f32 %v701, %v707
        %v710 = vmul.f32 %v702, %v707
        %v712 = vlaneseq
        %v713 = vshrl.u32 %v712, 7
        %v714 = vsub.s32 0, %v713
        %v715 = vrot.slane %v673, %v714
        %v717 = vadd.f32 %v709, %v715
        %v718 = vadd.f32 %v710, %v715
        %v719 = vpack.c.bf16 %v718, %v717
        %s720 = smul.u32 %s663, 4
        %s721 = smul.addr %s720, 4
        %s722 = scalar_lea.vmem %s4, %s721
        %v723 = vld [vmem:[%s722] sm:$0xf]
        %v724 = vld [vmem:[%s722 + $0x4] sm:$0xf]
        %v725 = vld [vmem:[%s722 + $0x8] sm:$0xf]
        %v726 = vld [vmem:[%s722 + $0xc] sm:$0xf]
        %s727 = scalar_lea.vmem %s5, %s663
        %v728 = vld [vmem:[%s727] sm:$0x1]
        %v730 = vlaneseq
        %v731 = vshrl.u32 %v730, 7
        %v732 = vsub.s32 0, %v731
        %v733 = vrot.slane %v728, %v732
        %v739 = vunpack.c.l.b16 %v723
        %v740 = vunpack.c.l.b16 %v724
        %v741 = vunpack.c.l.b16 %v725
        %v742 = vunpack.c.l.b16 %v726
        %v743 = vpack.c.b16 %v740, %v739
        %v744 = vpack.c.b16 %v742, %v741
        %v748 = vsel %vm674, %v719, 0
        %750 = vmatprep.subr.bf16.mxu0 0
        %751 = vmatpush1.bf16.msra.mxu0 0
        %752 = vmatprep.subr.bf16.mxu0 0
        %753 = vmatpush1.bf16.msra.mxu0 0
        %754 = vmatprep.subr.bf16.mxu0 0
        %755 = vmatpush1.bf16.msra.mxu0 0
        %756 = vmatprep.subr.bf16.mxu0 0
        %757 = vmatpush1.bf16.msra.mxu0 0
        %758 = vmatprep.subr.bf16.mxu0 0
        %759 = vmatpush1.bf16.msra.mxu0 0
        %760 = vmatprep.subr.bf16.mxu0 0
        %761 = vmatpush1.bf16.msra.mxu0 0
        %762 = vmatprep.subr.bf16.mxu0 0
        %763 = vmatpush1.bf16.msra.mxu0 %v744
        %764 = vmatprep.subr.bf16.mxu0 0
        %765 = vmatpush1.bf16.msra.mxu0 %v743
        %766 = vmatprep.subr.bf16.mxu0 0
        %767 = vmatpush2.bf16.msra.mxu0 0
        %768 = vmatprep.subr.bf16.mxu0 0
        %769 = vmatpush2.bf16.msra.mxu0 0
        %770 = vmatprep.subr.bf16.mxu0 0
        %771 = vmatpush2.bf16.msra.mxu0 0
        %772 = vmatprep.subr.bf16.mxu0 0
        %773 = vmatpush2.bf16.msra.mxu0 0
        %774 = vmatprep.subr.bf16.mxu0 0
        %775 = vmatpush2.bf16.msra.mxu0 0
        %776 = vmatprep.subr.bf16.mxu0 0
        %777 = vmatpush2.bf16.msra.mxu0 0
        %778 = vmatprep.subr.bf16.mxu0 0
        %779 = vmatpush2.bf16.msra.mxu0 0
        %780 = vmatprep.subr.bf16.mxu0 0
        %781 = vmatpush2.bf16.msra.mxu0 0
        %782 = vmatprep.mubr.bf16.mxu0 0
        %783 = vmatmul.mubr.bf16.gmra.mxu0 %v748
        %v784 = vpop.f32.mrf.mxu0
        %v785 = vadd.f32 %v733, %v784
        %v786 = vpop.f32.mrf.mxu0
        %v787 = vpop.f32.mrf.mxu0
        %v788 = vadd.f32 %v733, %v787
        %v789 = vpop.f32.mrf.mxu0
        %790 = vdwg.mxu0
        %s791 = smul.u32 %s663, 2
        %s792 = smul.addr %s791, 4
        %s793 = scalar_lea.vmem %s6, %s792
        %v794 = vld [vmem:[%s793] sm:$0xf]
        %v795 = vld [vmem:[%s793 + $0x4] sm:$0x3]
        %v796 = vpack.c.bf16 %v788, %v785
        %v799 = vunpack.c.l.b16 %v794
        %v800 = vunpack.c.l.b16 %v795
        %v801 = vpack.c.b16 %v800, %v799
        %vm802 = vcmask 64512
        %v804 = vsel %vm802, %v796, 0
        %v807 = vsel %vm802, %v801, 0
        %809 = vmatprep.subr.bf16.mxu0 0
        %810 = vmatpush1.bf16.xpose.msra.mxu0 0
        %811 = vmatprep.subr.bf16.mxu0 0
        %812 = vmatpush1.bf16.xpose.msra.mxu0 0
        %813 = vmatprep.subr.bf16.mxu0 0
        %814 = vmatpush1.bf16.xpose.msra.mxu0 0
        %815 = vmatprep.subr.bf16.mxu0 0
        %816 = vmatpush1.bf16.xpose.msra.mxu0 0
        %817 = vmatprep.subr.bf16.mxu0 0
        %818 = vmatpush1.bf16.xpose.msra.mxu0 0
        %819 = vmatprep.subr.bf16.mxu0 0
        %820 = vmatpush1.bf16.xpose.msra.mxu0 0
        %821 = vmatprep.subr.bf16.mxu0 0
        %822 = vmatpush1.bf16.xpose.msra.mxu0 0
        %823 = vmatprep.subr.bf16.mxu0 0
        %824 = vmatpush1.bf16.xpose.msra.mxu0 %v807
        %825 = vmatprep.subr.bf16.mxu0 0
        %826 = vmatpush2.bf16.xpose.msra.mxu0 0
        %827 = vmatprep.subr.bf16.mxu0 0
        %828 = vmatpush2.bf16.xpose.msra.mxu0 0
        %829 = vmatprep.subr.bf16.mxu0 0
        %830 = vmatpush2.bf16.xpose.msra.mxu0 0
        %831 = vmatprep.subr.bf16.mxu0 0
        %832 = vmatpush2.bf16.xpose.msra.mxu0 0
        %833 = vmatprep.subr.bf16.mxu0 0
        %834 = vmatpush2.bf16.xpose.msra.mxu0 0
        %835 = vmatprep.subr.bf16.mxu0 0
        %836 = vmatpush2.bf16.xpose.msra.mxu0 0
        %837 = vmatprep.subr.bf16.mxu0 0
        %838 = vmatpush2.bf16.xpose.msra.mxu0 0
        %839 = vmatprep.subr.bf16.mxu0 0
        %840 = vmatpush2.bf16.xpose.msra.mxu0 0
        %841 = vmatprep.mubr.bf16.mxu0 0
        %842 = vmatmul.mubr.bf16.gmra.mxu0 %v804
        %v843 = vpop.f32.mrf.mxu0
        %v844 = vadd.f32 0.0, %v843
        %v845 = vpop.f32.mrf.mxu0
        %v846 = vpop.f32.mrf.mxu0
        %v847 = vadd.f32 0.0, %v846
        %v848 = vpop.f32.mrf.mxu0
        %849 = vdwg.mxu0
        %852 = vrot.lane.b32.xlu0 %v844, 127
        %v853 = vpop.permute.xlu0 %852
        %854 = vrot.lane.b32.xlu0 %v847, 127
        %v855 = vpop.permute.xlu0 %854
        %858 = vrot.lane.b32.xlu0 %v844, 11
        %v859 = vpop.permute.xlu0 %858
        %860 = vrot.lane.b32.xlu0 %v847, 11
        %v861 = vpop.permute.xlu0 %860
        %vm864 = vcmask 89088
        %v865 = vsel %vm864, %v853, %v859
        %v866 = vsel %vm864, %v855, %v861
        %v867 = vsel %vm563, %v865, %v844
        %v868 = vsel %vm564, %v866, %v847
        %871 = vrot.lane.b32.xlu0 %v867, 126
        %v872 = vpop.permute.xlu0 %871
        %873 = vrot.lane.b32.xlu0 %v868, 126
        %v874 = vpop.permute.xlu0 %873
        %877 = vrot.lane.b32.xlu0 %v867, 10
        %v878 = vpop.permute.xlu0 %877
        %879 = vrot.lane.b32.xlu0 %v868, 10
        %v880 = vpop.permute.xlu0 %879
        %vm883 = vcmask 80896
        %v884 = vsel %vm883, %v872, %v878
        %v885 = vsel %vm883, %v874, %v880
        %v886 = vsel %vm569, %v884, %v867
        %v887 = vsel %vm570, %v885, %v868
        %890 = vrot.lane.b32.xlu0 %v886, 124
        %v891 = vpop.permute.xlu0 %890
        %892 = vrot.lane.b32.xlu0 %v887, 124
        %v893 = vpop.permute.xlu0 %892
        %896 = vrot.lane.b32.xlu0 %v886, 8
        %v897 = vpop.permute.xlu0 %896
        %898 = vrot.lane.b32.xlu0 %v887, 8
        %v899 = vpop.permute.xlu0 %898
        %v902 = vsel %vm802, %v891, %v897
        %v903 = vsel %vm802, %v893, %v899
        %v904 = vsel %vm575, %v902, %v886
        %v905 = vsel %vm576, %v903, %v887
        %908 = vrot.lane.b32.xlu0 %v904, 120
        %v909 = vpop.permute.xlu0 %908
        %910 = vrot.lane.b32.xlu0 %v905, 120
        %v911 = vpop.permute.xlu0 %910
        %914 = vrot.lane.b32.xlu0 %v904, 4
        %v915 = vpop.permute.xlu0 %914
        %916 = vrot.lane.b32.xlu0 %v905, 4
        %v917 = vpop.permute.xlu0 %916
        %vm920 = vcmask 31744
        %v921 = vsel %vm920, %v909, %v915
        %v922 = vsel %vm920, %v911, %v917
        %v923 = vsel %vm581, %v921, %v904
        %v924 = vsel %vm582, %v922, %v905
        %926 = vrot.lane.b32.xlu0 %v796, 96
        %v927 = vpop.permute.xlu0 %926
        %v929 = vsel %vm802, %v927, 0
        %931 = vmatprep.subr.bf16.mxu0 0
        %932 = vmatpush1.bf16.xpose.msra.mxu0 0
        %933 = vmatprep.subr.bf16.mxu0 0
        %934 = vmatpush1.bf16.xpose.msra.mxu0 0
        %935 = vmatprep.subr.bf16.mxu0 0
        %936 = vmatpush1.bf16.xpose.msra.mxu0 0
        %937 = vmatprep.subr.bf16.mxu0 0
        %938 = vmatpush1.bf16.xpose.msra.mxu0 0
        %939 = vmatprep.subr.bf16.mxu0 0
        %940 = vmatpush1.bf16.xpose.msra.mxu0 0
        %941 = vmatprep.subr.bf16.mxu0 0
        %942 = vmatpush1.bf16.xpose.msra.mxu0 0
        %943 = vmatprep.subr.bf16.mxu0 0
        %944 = vmatpush1.bf16.xpose.msra.mxu0 0
        %945 = vmatprep.subr.bf16.mxu0 0
        %946 = vmatpush1.bf16.xpose.msra.mxu0 %v929
        %947 = vmatprep.subr.bf16.mxu0 0
        %948 = vmatpush2.bf16.xpose.msra.mxu0 0
        %949 = vmatprep.subr.bf16.mxu0 0
        %950 = vmatpush2.bf16.xpose.msra.mxu0 0
        %951 = vmatprep.subr.bf16.mxu0 0
        %952 = vmatpush2.bf16.xpose.msra.mxu0 0
        %953 = vmatprep.subr.bf16.mxu0 0
        %954 = vmatpush2.bf16.xpose.msra.mxu0 0
        %955 = vmatprep.subr.bf16.mxu0 0
        %956 = vmatpush2.bf16.xpose.msra.mxu0 0
        %957 = vmatprep.subr.bf16.mxu0 0
        %958 = vmatpush2.bf16.xpose.msra.mxu0 0
        %959 = vmatprep.subr.bf16.mxu0 0
        %960 = vmatpush2.bf16.xpose.msra.mxu0 0
        %961 = vmatprep.subr.bf16.mxu0 0
        %962 = vmatpush2.bf16.xpose.msra.mxu0 0
        %963 = vmatprep.mubr.bf16.mxu0 0
        %964 = vmatmul.mubr.bf16.gmra.mxu0 %v804
        %v965 = vpop.f32.mrf.mxu0
        %v966 = vadd.f32 %v923, %v965
        %v967 = vpop.f32.mrf.mxu0
        %v968 = vpop.f32.mrf.mxu0
        %v969 = vadd.f32 %v924, %v968
        %v970 = vpop.f32.mrf.mxu0
        %971 = vdwg.mxu0
        %v972 = vadd.f32 %v966, %v557
        %v973 = vadd.f32 %v969, %v558
        %vm974 = vcmask 97280
        %v975 = vsel %vm974, %v972, -inf
        %976 = vmax.xlane.f32.xlu0 %v975
        %v977 = vpop.xlane.xlu0 %976
        %vm978 = vcmask 93184
        %v979 = vsel %vm978, %v973, -inf
        %980 = vmax.xlane.f32.xlu0 %v979
        %v981 = vpop.xlane.xlu0 %980
        %v982 = vsub.f32 %v972, %v977
        %v983 = vsub.f32 %v973, %v981
        %v984 = vmul.f32 %v982, 1.442695
        %v985 = vpow.pop %v984
        %v986 = vmul.f32 %v983, 1.442695
        %v987 = vpow.pop %v986
        %v988 = vsel %vm974, %v985, 0.0
        %989 = vadd.xlane.f32.xlu0 %v988
        %v990 = vpop.xlane.xlu0 %989
        %v991 = vsel %vm978, %v987, 0.0
        %992 = vadd.xlane.f32.xlu0 %v991
        %v993 = vpop.xlane.xlu0 %992
        %v994 = vrcp.pop %v990
        %v995 = vrcp.pop %v993
        %v996 = vmul.f32 %v985, %v994
        %v997 = vmul.f32 %v987, %v995
        %v998 = vpack.c.bf16 %v997, %v996
        %999 = vrot.lane.b32.xlu0 %v796, 64
        %v1000 = vpop.permute.xlu0 %999
        %v1002 = vsel %vm974, %v998, 0
        %vm1004 = vcmask 1045504
        %v1006 = vsel %vm1004, %v1000, 0
        %1008 = vmatprep.subr.bf16.mxu0 0
        %1009 = vmatpush1.bf16.msra.mxu0 0
        %1010 = vmatprep.subr.bf16.mxu0 0
        %1011 = vmatpush1.bf16.msra.mxu0 0
        %1012 = vmatprep.subr.bf16.mxu0 0
        %1013 = vmatpush1.bf16.msra.mxu0 0
        %1014 = vmatprep.subr.bf16.mxu0 0
        %1015 = vmatpush1.bf16.msra.mxu0 0
        %1016 = vmatprep.subr.bf16.mxu0 0
        %1017 = vmatpush1.bf16.msra.mxu0 0
        %1018 = vmatprep.subr.bf16.mxu0 0
        %1019 = vmatpush1.bf16.msra.mxu0 0
        %1020 = vmatprep.subr.bf16.mxu0 0
        %1021 = vmatpush1.bf16.msra.mxu0 0
        %1022 = vmatprep.subr.bf16.mxu0 0
        %1023 = vmatpush1.bf16.msra.mxu0 %v1006
        %1024 = vmatprep.subr.bf16.mxu0 0
        %1025 = vmatpush2.bf16.msra.mxu0 0
        %1026 = vmatprep.subr.bf16.mxu0 0
        %1027 = vmatpush2.bf16.msra.mxu0 0
        %1028 = vmatprep.subr.bf16.mxu0 0
        %1029 = vmatpush2.bf16.msra.mxu0 0
        %1030 = vmatprep.subr.bf16.mxu0 0
        %1031 = vmatpush2.bf16.msra.mxu0 0
        %1032 = vmatprep.subr.bf16.mxu0 0
        %1033 = vmatpush2.bf16.msra.mxu0 0
        %1034 = vmatprep.subr.bf16.mxu0 0
        %1035 = vmatpush2.bf16.msra.mxu0 0
        %1036 = vmatprep.subr.bf16.mxu0 0
        %1037 = vmatpush2.bf16.msra.mxu0 0
        %1038 = vmatprep.subr.bf16.mxu0 0
        %1039 = vmatpush2.bf16.msra.mxu0 0
        %1040 = vmatprep.mubr.bf16.mxu0 0
        %1041 = vmatmul.mubr.bf16.gmra.mxu0 %v1002
        %v1042 = vpop.f32.mrf.mxu0
        %v1043 = vadd.f32 0.0, %v1042
        %v1044 = vpop.f32.mrf.mxu0
        %v1045 = vpop.f32.mrf.mxu0
        %v1046 = vadd.f32 0.0, %v1045
        %v1047 = vpop.f32.mrf.mxu0
        %1048 = vdwg.mxu0
        %1049 = vrot.lane.b32.xlu0 %v796, 120
        %v1050 = vpop.permute.xlu0 %1049
        %v1052 = vsel %vm802, %v1050, 0
        %1054 = vmatprep.subr.bf16.mxu0 0
        %1055 = vmatpush1.bf16.xpose.msra.mxu0 0
        %1056 = vmatprep.subr.bf16.mxu0 0
        %1057 = vmatpush1.bf16.xpose.msra.mxu0 0
        %1058 = vmatprep.subr.bf16.mxu0 0
        %1059 = vmatpush1.bf16.xpose.msra.mxu0 0
        %1060 = vmatprep.subr.bf16.mxu0 0
        %1061 = vmatpush1.bf16.xpose.msra.mxu0 0
        %1062 = vmatprep.subr.bf16.mxu0 0
        %1063 = vmatpush1.bf16.xpose.msra.mxu0 0
        %1064 = vmatprep.subr.bf16.mxu0 0
        %1065 = vmatpush1.bf16.xpose.msra.mxu0 0
        %1066 = vmatprep.subr.bf16.mxu0 0
        %1067 = vmatpush1.bf16.xpose.msra.mxu0 0
        %1068 = vmatprep.subr.bf16.mxu0 0
        %1069 = vmatpush1.bf16.xpose.msra.mxu0 %v807
        %1070 = vmatprep.subr.bf16.mxu0 0
        %1071 = vmatpush2.bf16.xpose.msra.mxu0 0
        %1072 = vmatprep.subr.bf16.mxu0 0
        %1073 = vmatpush2.bf16.xpose.msra.mxu0 0
        %1074 = vmatprep.subr.bf16.mxu0 0
        %1075 = vmatpush2.bf16.xpose.msra.mxu0 0
        %1076 = vmatprep.subr.bf16.mxu0 0
        %1077 = vmatpush2.bf16.xpose.msra.mxu0 0
        %1078 = vmatprep.subr.bf16.mxu0 0
        %1079 = vmatpush2.bf16.xpose.msra.mxu0 0
        %1080 = vmatprep.subr.bf16.mxu0 0
        %1081 = vmatpush2.bf16.xpose.msra.mxu0 0
        %1082 = vmatprep.subr.bf16.mxu0 0
        %1083 = vmatpush2.bf16.xpose.msra.mxu0 0
        %1084 = vmatprep.subr.bf16.mxu0 0
        %1085 = vmatpush2.bf16.xpose.msra.mxu0 0
        %1086 = vmatprep.mubr.bf16.mxu0 0
        %1087 = vmatmul.mubr.bf16.gmra.mxu0 %v1052
        %v1088 = vpop.f32.mrf.mxu0
        %v1089 = vadd.f32 0.0, %v1088
        %v1090 = vpop.f32.mrf.mxu0
        %v1091 = vpop.f32.mrf.mxu0
        %v1092 = vadd.f32 0.0, %v1091
        %v1093 = vpop.f32.mrf.mxu0
        %1094 = vdwg.mxu0
        %1097 = vrot.lane.b32.xlu0 %v1089, 127
        %v1098 = vpop.permute.xlu0 %1097
        %1099 = vrot.lane.b32.xlu0 %v1092, 127
        %v1100 = vpop.permute.xlu0 %1099
        %1103 = vrot.lane.b32.xlu0 %v1089, 11
        %v1104 = vpop.permute.xlu0 %1103
        %1105 = vrot.lane.b32.xlu0 %v1092, 11
        %v1106 = vpop.permute.xlu0 %1105
        %v1109 = vsel %vm864, %v1098, %v1104
        %v1110 = vsel %vm864, %v1100, %v1106
        %v1111 = vsel %vm563, %v1109, %v1089
        %v1112 = vsel %vm564, %v1110, %v1092
        %1115 = vrot.lane.b32.xlu0 %v1111, 126
        %v1116 = vpop.permute.xlu0 %1115
        %1117 = vrot.lane.b32.xlu0 %v1112, 126
        %v1118 = vpop.permute.xlu0 %1117
        %1121 = vrot.lane.b32.xlu0 %v1111, 10
        %v1122 = vpop.permute.xlu0 %1121
        %1123 = vrot.lane.b32.xlu0 %v1112, 10
        %v1124 = vpop.permute.xlu0 %1123
        %v1127 = vsel %vm883, %v1116, %v1122
        %v1128 = vsel %vm883, %v1118, %v1124
        %v1129 = vsel %vm569, %v1127, %v1111
        %v1130 = vsel %vm570, %v1128, %v1112
        %1133 = vrot.lane.b32.xlu0 %v1129, 124
        %v1134 = vpop.permute.xlu0 %1133
        %1135 = vrot.lane.b32.xlu0 %v1130, 124
        %v1136 = vpop.permute.xlu0 %1135
        %1139 = vrot.lane.b32.xlu0 %v1129, 8
        %v1140 = vpop.permute.xlu0 %1139
        %1141 = vrot.lane.b32.xlu0 %v1130, 8
        %v1142 = vpop.permute.xlu0 %1141
        %v1145 = vsel %vm802, %v1134, %v1140
        %v1146 = vsel %vm802, %v1136, %v1142
        %v1147 = vsel %vm575, %v1145, %v1129
        %v1148 = vsel %vm576, %v1146, %v1130
        %1151 = vrot.lane.b32.xlu0 %v1147, 120
        %v1152 = vpop.permute.xlu0 %1151
        %1153 = vrot.lane.b32.xlu0 %v1148, 120
        %v1154 = vpop.permute.xlu0 %1153
        %1157 = vrot.lane.b32.xlu0 %v1147, 4
        %v1158 = vpop.permute.xlu0 %1157
        %1159 = vrot.lane.b32.xlu0 %v1148, 4
        %v1160 = vpop.permute.xlu0 %1159
        %v1163 = vsel %vm920, %v1152, %v1158
        %v1164 = vsel %vm920, %v1154, %v1160
        %v1165 = vsel %vm581, %v1163, %v1147
        %v1166 = vsel %vm582, %v1164, %v1148
        %1167 = vrot.lane.b32.xlu0 %v796, 88
        %v1168 = vpop.permute.xlu0 %1167
        %v1170 = vsel %vm802, %v1168, 0
        %1172 = vmatprep.subr.bf16.mxu0 0
        %1173 = vmatpush1.bf16.xpose.msra.mxu0 0
        %1174 = vmatprep.subr.bf16.mxu0 0
        %1175 = vmatpush1.bf16.xpose.msra.mxu0 0
        %1176 = vmatprep.subr.bf16.mxu0 0
        %1177 = vmatpush1.bf16.xpose.msra.mxu0 0
        %1178 = vmatprep.subr.bf16.mxu0 0
        %1179 = vmatpush1.bf16.xpose.msra.mxu0 0
        %1180 = vmatprep.subr.bf16.mxu0 0
        %1181 = vmatpush1.bf16.xpose.msra.mxu0 0
        %1182 = vmatprep.subr.bf16.mxu0 0
        %1183 = vmatpush1.bf16.xpose.msra.mxu0 0
        %1184 = vmatprep.subr.bf16.mxu0 0
        %1185 = vmatpush1.bf16.xpose.msra.mxu0 0
        %1186 = vmatprep.subr.bf16.mxu0 0
        %1187 = vmatpush1.bf16.xpose.msra.mxu0 %v1170
        %1188 = vmatprep.subr.bf16.mxu0 0
        %1189 = vmatpush2.bf16.xpose.msra.mxu0 0
        %1190 = vmatprep.subr.bf16.mxu0 0
        %1191 = vmatpush2.bf16.xpose.msra.mxu0 0
        %1192 = vmatprep.subr.bf16.mxu0 0
        %1193 = vmatpush2.bf16.xpose.msra.mxu0 0
        %1194 = vmatprep.subr.bf16.mxu0 0
        %1195 = vmatpush2.bf16.xpose.msra.mxu0 0
        %1196 = vmatprep.subr.bf16.mxu0 0
        %1197 = vmatpush2.bf16.xpose.msra.mxu0 0
        %1198 = vmatprep.subr.bf16.mxu0 0
        %1199 = vmatpush2.bf16.xpose.msra.mxu0 0
        %1200 = vmatprep.subr.bf16.mxu0 0
        %1201 = vmatpush2.bf16.xpose.msra.mxu0 0
        %1202 = vmatprep.subr.bf16.mxu0 0
        %1203 = vmatpush2.bf16.xpose.msra.mxu0 0
        %1204 = vmatprep.mubr.bf16.mxu0 0
        %1205 = vmatmul.mubr.bf16.gmra.mxu0 %v1052
        %v1206 = vpop.f32.mrf.mxu0
        %v1207 = vadd.f32 %v1165, %v1206
        %v1208 = vpop.f32.mrf.mxu0
        %v1209 = vpop.f32.mrf.mxu0
        %v1210 = vadd.f32 %v1166, %v1209
        %v1211 = vpop.f32.mrf.mxu0
        %1212 = vdwg.mxu0
        %v1213 = vadd.f32 %v1207, %v557
        %v1214 = vadd.f32 %v1210, %v558
        %v1215 = vsel %vm974, %v1213, -inf
        %1216 = vmax.xlane.f32.xlu0 %v1215
        %v1217 = vpop.xlane.xlu0 %1216
        %v1218 = vsel %vm978, %v1214, -inf
        %1219 = vmax.xlane.f32.xlu0 %v1218
        %v1220 = vpop.xlane.xlu0 %1219
        %v1221 = vsub.f32 %v1213, %v1217
        %v1222 = vsub.f32 %v1214, %v1220
        %v1223 = vmul.f32 %v1221, 1.442695
        %v1224 = vpow.pop %v1223
        %v1225 = vmul.f32 %v1222, 1.442695
        %v1226 = vpow.pop %v1225
        %v1227 = vsel %vm974, %v1224, 0.0
        %1228 = vadd.xlane.f32.xlu0 %v1227
        %v1229 = vpop.xlane.xlu0 %1228
        %v1230 = vsel %vm978, %v1226, 0.0
        %1231 = vadd.xlane.f32.xlu0 %v1230
        %v1232 = vpop.xlane.xlu0 %1231
        %v1233 = vrcp.pop %v1229
        %v1234 = vrcp.pop %v1232
        %v1235 = vmul.f32 %v1224, %v1233
        %v1236 = vmul.f32 %v1226, %v1234
        %v1237 = vpack.c.bf16 %v1236, %v1235
        %1238 = vrot.lane.b32.xlu0 %v796, 56
        %v1239 = vpop.permute.xlu0 %1238
        %v1241 = vsel %vm974, %v1237, 0
        %v1244 = vsel %vm1004, %v1239, 0
        %1246 = vmatprep.subr.bf16.mxu0 0
        %1247 = vmatpush1.bf16.msra.mxu0 0
        %1248 = vmatprep.subr.bf16.mxu0 0
        %1249 = vmatpush1.bf16.msra.mxu0 0
        %1250 = vmatprep.subr.bf16.mxu0 0
        %1251 = vmatpush1.bf16.msra.mxu0 0
        %1252 = vmatprep.subr.bf16.mxu0 0
        %1253 = vmatpush1.bf16.msra.mxu0 0
        %1254 = vmatprep.subr.bf16.mxu0 0
        %1255 = vmatpush1.bf16.msra.mxu0 0
        %1256 = vmatprep.subr.bf16.mxu0 0
        %1257 = vmatpush1.bf16.msra.mxu0 0
        %1258 = vmatprep.subr.bf16.mxu0 0
        %1259 = vmatpush1.bf16.msra.mxu0 0
        %1260 = vmatprep.subr.bf16.mxu0 0
        %1261 = vmatpush1.bf16.msra.mxu0 %v1244
        %1262 = vmatprep.subr.bf16.mxu0 0
        %1263 = vmatpush2.bf16.msra.mxu0 0
        %1264 = vmatprep.subr.bf16.mxu0 0
        %1265 = vmatpush2.bf16.msra.mxu0 0
        %1266 = vmatprep.subr.bf16.mxu0 0
        %1267 = vmatpush2.bf16.msra.mxu0 0
        %1268 = vmatprep.subr.bf16.mxu0 0
        %1269 = vmatpush2.bf16.msra.mxu0 0
        %1270 = vmatprep.subr.bf16.mxu0 0
        %1271 = vmatpush2.bf16.msra.mxu0 0
        %1272 = vmatprep.subr.bf16.mxu0 0
        %1273 = vmatpush2.bf16.msra.mxu0 0
        %1274 = vmatprep.subr.bf16.mxu0 0
        %1275 = vmatpush2.bf16.msra.mxu0 0
        %1276 = vmatprep.subr.bf16.mxu0 0
        %1277 = vmatpush2.bf16.msra.mxu0 0
        %1278 = vmatprep.mubr.bf16.mxu0 0
        %1279 = vmatmul.mubr.bf16.gmra.mxu0 %v1241
        %v1280 = vpop.f32.mrf.mxu0
        %v1281 = vadd.f32 0.0, %v1280
        %v1282 = vpop.f32.mrf.mxu0
        %v1283 = vpop.f32.mrf.mxu0
        %v1284 = vadd.f32 0.0, %v1283
        %v1285 = vpop.f32.mrf.mxu0
        %1286 = vdwg.mxu0
        %1287 = vrot.lane.b32.xlu0 %v796, 112
        %v1288 = vpop.permute.xlu0 %1287
        %v1290 = vsel %vm802, %v1288, 0
        %1292 = vmatprep.subr.bf16.mxu0 0
        %1293 = vmatpush1.bf16.xpose.msra.mxu0 0
        %1294 = vmatprep.subr.bf16.mxu0 0
        %1295 = vmatpush1.bf16.xpose.msra.mxu0 0
        %1296 = vmatprep.subr.bf16.mxu0 0
        %1297 = vmatpush1.bf16.xpose.msra.mxu0 0
        %1298 = vmatprep.subr.bf16.mxu0 0
        %1299 = vmatpush1.bf16.xpose.msra.mxu0 0
        %1300 = vmatprep.subr.bf16.mxu0 0
        %1301 = vmatpush1.bf16.xpose.msra.mxu0 0
        %1302 = vmatprep.subr.bf16.mxu0 0
        %1303 = vmatpush1.bf16.xpose.msra.mxu0 0
        %1304 = vmatprep.subr.bf16.mxu0 0
        %1305 = vmatpush1.bf16.xpose.msra.mxu0 0
        %1306 = vmatprep.subr.bf16.mxu0 0
        %1307 = vmatpush1.bf16.xpose.msra.mxu0 %v807
        %1308 = vmatprep.subr.bf16.mxu0 0
        %1309 = vmatpush2.bf16.xpose.msra.mxu0 0
        %1310 = vmatprep.subr.bf16.mxu0 0
        %1311 = vmatpush2.bf16.xpose.msra.mxu0 0
        %1312 = vmatprep.subr.bf16.mxu0 0
        %1313 = vmatpush2.bf16.xpose.msra.mxu0 0
        %1314 = vmatprep.subr.bf16.mxu0 0
        %1315 = vmatpush2.bf16.xpose.msra.mxu0 0
        %1316 = vmatprep.subr.bf16.mxu0 0
        %1317 = vmatpush2.bf16.xpose.msra.mxu0 0
        %1318 = vmatprep.subr.bf16.mxu0 0
        %1319 = vmatpush2.bf16.xpose.msra.mxu0 0
        %1320 = vmatprep.subr.bf16.mxu0 0
        %1321 = vmatpush2.bf16.xpose.msra.mxu0 0
        %1322 = vmatprep.subr.bf16.mxu0 0
        %1323 = vmatpush2.bf16.xpose.msra.mxu0 0
        %1324 = vmatprep.mubr.bf16.mxu0 0
        %1325 = vmatmul.mubr.bf16.gmra.mxu0 %v1290
        %v1326 = vpop.f32.mrf.mxu0
        %v1327 = vadd.f32 0.0, %v1326
        %v1328 = vpop.f32.mrf.mxu0
        %v1329 = vpop.f32.mrf.mxu0
        %v1330 = vadd.f32 0.0, %v1329
        %v1331 = vpop.f32.mrf.mxu0
        %1332 = vdwg.mxu0
        %1335 = vrot.lane.b32.xlu0 %v1327, 127
        %v1336 = vpop.permute.xlu0 %1335
        %1337 = vrot.lane.b32.xlu0 %v1330, 127
        %v1338 = vpop.permute.xlu0 %1337
        %1341 = vrot.lane.b32.xlu0 %v1327, 11
        %v1342 = vpop.permute.xlu0 %1341
        %1343 = vrot.lane.b32.xlu0 %v1330, 11
        %v1344 = vpop.permute.xlu0 %1343
        %v1347 = vsel %vm864, %v1336, %v1342
        %v1348 = vsel %vm864, %v1338, %v1344
        %v1349 = vsel %vm563, %v1347, %v1327
        %v1350 = vsel %vm564, %v1348, %v1330
        %1353 = vrot.lane.b32.xlu0 %v1349, 126
        %v1354 = vpop.permute.xlu0 %1353
        %1355 = vrot.lane.b32.xlu0 %v1350, 126
        %v1356 = vpop.permute.xlu0 %1355
        %1359 = vrot.lane.b32.xlu0 %v1349, 10
        %v1360 = vpop.permute.xlu0 %1359
        %1361 = vrot.lane.b32.xlu0 %v1350, 10
        %v1362 = vpop.permute.xlu0 %1361
        %v1365 = vsel %vm883, %v1354, %v1360
        %v1366 = vsel %vm883, %v1356, %v1362
        %v1367 = vsel %vm569, %v1365, %v1349
        %v1368 = vsel %vm570, %v1366, %v1350
        %1371 = vrot.lane.b32.xlu0 %v1367, 124
        %v1372 = vpop.permute.xlu0 %1371
        %1373 = vrot.lane.b32.xlu0 %v1368, 124
        %v1374 = vpop.permute.xlu0 %1373
        %1377 = vrot.lane.b32.xlu0 %v1367, 8
        %v1378 = vpop.permute.xlu0 %1377
        %1379 = vrot.lane.b32.xlu0 %v1368, 8
        %v1380 = vpop.permute.xlu0 %1379
        %v1383 = vsel %vm802, %v1372, %v1378
        %v1384 = vsel %vm802, %v1374, %v1380
        %v1385 = vsel %vm575, %v1383, %v1367
        %v1386 = vsel %vm576, %v1384, %v1368
        %1389 = vrot.lane.b32.xlu0 %v1385, 120
        %v1390 = vpop.permute.xlu0 %1389
        %1391 = vrot.lane.b32.xlu0 %v1386, 120
        %v1392 = vpop.permute.xlu0 %1391
        %1395 = vrot.lane.b32.xlu0 %v1385, 4
        %v1396 = vpop.permute.xlu0 %1395
        %1397 = vrot.lane.b32.xlu0 %v1386, 4
        %v1398 = vpop.permute.xlu0 %1397
        %v1401 = vsel %vm920, %v1390, %v1396
        %v1402 = vsel %vm920, %v1392, %v1398
        %v1403 = vsel %vm581, %v1401, %v1385
        %v1404 = vsel %vm582, %v1402, %v1386
        %1405 = vrot.lane.b32.xlu0 %v796, 80
        %v1406 = vpop.permute.xlu0 %1405
        %v1408 = vsel %vm802, %v1406, 0
        %1410 = vmatprep.subr.bf16.mxu0 0
        %1411 = vmatpush1.bf16.xpose.msra.mxu0 0
        %1412 = vmatprep.subr.bf16.mxu0 0
        %1413 = vmatpush1.bf16.xpose.msra.mxu0 0
        %1414 = vmatprep.subr.bf16.mxu0 0
        %1415 = vmatpush1.bf16.xpose.msra.mxu0 0
        %1416 = vmatprep.subr.bf16.mxu0 0
        %1417 = vmatpush1.bf16.xpose.msra.mxu0 0
        %1418 = vmatprep.subr.bf16.mxu0 0
        %1419 = vmatpush1.bf16.xpose.msra.mxu0 0
        %1420 = vmatprep.subr.bf16.mxu0 0
        %1421 = vmatpush1.bf16.xpose.msra.mxu0 0
        %1422 = vmatprep.subr.bf16.mxu0 0
        %1423 = vmatpush1.bf16.xpose.msra.mxu0 0
        %1424 = vmatprep.subr.bf16.mxu0 0
        %1425 = vmatpush1.bf16.xpose.msra.mxu0 %v1408
        %1426 = vmatprep.subr.bf16.mxu0 0
        %1427 = vmatpush2.bf16.xpose.msra.mxu0 0
        %1428 = vmatprep.subr.bf16.mxu0 0
        %1429 = vmatpush2.bf16.xpose.msra.mxu0 0
        %1430 = vmatprep.subr.bf16.mxu0 0
        %1431 = vmatpush2.bf16.xpose.msra.mxu0 0
        %1432 = vmatprep.subr.bf16.mxu0 0
        %1433 = vmatpush2.bf16.xpose.msra.mxu0 0
        %1434 = vmatprep.subr.bf16.mxu0 0
        %1435 = vmatpush2.bf16.xpose.msra.mxu0 0
        %1436 = vmatprep.subr.bf16.mxu0 0
        %1437 = vmatpush2.bf16.xpose.msra.mxu0 0
        %1438 = vmatprep.subr.bf16.mxu0 0
        %1439 = vmatpush2.bf16.xpose.msra.mxu0 0
        %1440 = vmatprep.subr.bf16.mxu0 0
        %1441 = vmatpush2.bf16.xpose.msra.mxu0 0
        %1442 = vmatprep.mubr.bf16.mxu0 0
        %1443 = vmatmul.mubr.bf16.gmra.mxu0 %v1290
        %v1444 = vpop.f32.mrf.mxu0
        %v1445 = vadd.f32 %v1403, %v1444
        %v1446 = vpop.f32.mrf.mxu0
        %v1447 = vpop.f32.mrf.mxu0
        %v1448 = vadd.f32 %v1404, %v1447
        %v1449 = vpop.f32.mrf.mxu0
        %1450 = vdwg.mxu0
        %v1451 = vadd.f32 %v1445, %v557
        %v1452 = vadd.f32 %v1448, %v558
        %v1453 = vsel %vm974, %v1451, -inf
        %1454 = vmax.xlane.f32.xlu0 %v1453
        %v1455 = vpop.xlane.xlu0 %1454
        %v1456 = vsel %vm978, %v1452, -inf
        %1457 = vmax.xlane.f32.xlu0 %v1456
        %v1458 = vpop.xlane.xlu0 %1457
        %v1459 = vsub.f32 %v1451, %v1455
        %v1460 = vsub.f32 %v1452, %v1458
        %v1461 = vmul.f32 %v1459, 1.442695
        %v1462 = vpow.pop %v1461
        %v1463 = vmul.f32 %v1460, 1.442695
        %v1464 = vpow.pop %v1463
        %v1465 = vsel %vm974, %v1462, 0.0
        %1466 = vadd.xlane.f32.xlu0 %v1465
        %v1467 = vpop.xlane.xlu0 %1466
        %v1468 = vsel %vm978, %v1464, 0.0
        %1469 = vadd.xlane.f32.xlu0 %v1468
        %v1470 = vpop.xlane.xlu0 %1469
        %v1471 = vrcp.pop %v1467
        %v1472 = vrcp.pop %v1470
        %v1473 = vmul.f32 %v1462, %v1471
        %v1474 = vmul.f32 %v1464, %v1472
        %v1475 = vpack.c.bf16 %v1474, %v1473
        %1476 = vrot.lane.b32.xlu0 %v796, 48
        %v1477 = vpop.permute.xlu0 %1476
        %v1479 = vsel %vm974, %v1475, 0
        %v1482 = vsel %vm1004, %v1477, 0
        %1484 = vmatprep.subr.bf16.mxu0 0
        %1485 = vmatpush1.bf16.msra.mxu0 0
        %1486 = vmatprep.subr.bf16.mxu0 0
        %1487 = vmatpush1.bf16.msra.mxu0 0
        %1488 = vmatprep.subr.bf16.mxu0 0
        %1489 = vmatpush1.bf16.msra.mxu0 0
        %1490 = vmatprep.subr.bf16.mxu0 0
        %1491 = vmatpush1.bf16.msra.mxu0 0
        %1492 = vmatprep.subr.bf16.mxu0 0
        %1493 = vmatpush1.bf16.msra.mxu0 0
        %1494 = vmatprep.subr.bf16.mxu0 0
        %1495 = vmatpush1.bf16.msra.mxu0 0
        %1496 = vmatprep.subr.bf16.mxu0 0
        %1497 = vmatpush1.bf16.msra.mxu0 0
        %1498 = vmatprep.subr.bf16.mxu0 0
        %1499 = vmatpush1.bf16.msra.mxu0 %v1482
        %1500 = vmatprep.subr.bf16.mxu0 0
        %1501 = vmatpush2.bf16.msra.mxu0 0
        %1502 = vmatprep.subr.bf16.mxu0 0
        %1503 = vmatpush2.bf16.msra.mxu0 0
        %1504 = vmatprep.subr.bf16.mxu0 0
        %1505 = vmatpush2.bf16.msra.mxu0 0
        %1506 = vmatprep.subr.bf16.mxu0 0
        %1507 = vmatpush2.bf16.msra.mxu0 0
        %1508 = vmatprep.subr.bf16.mxu0 0
        %1509 = vmatpush2.bf16.msra.mxu0 0
        %1510 = vmatprep.subr.bf16.mxu0 0
        %1511 = vmatpush2.bf16.msra.mxu0 0
        %1512 = vmatprep.subr.bf16.mxu0 0
        %1513 = vmatpush2.bf16.msra.mxu0 0
        %1514 = vmatprep.subr.bf16.mxu0 0
        %1515 = vmatpush2.bf16.msra.mxu0 0
        %1516 = vmatprep.mubr.bf16.mxu0 0
        %1517 = vmatmul.mubr.bf16.gmra.mxu0 %v1479
        %v1518 = vpop.f32.mrf.mxu0
        %v1519 = vadd.f32 0.0, %v1518
        %v1520 = vpop.f32.mrf.mxu0
        %v1521 = vpop.f32.mrf.mxu0
        %v1522 = vadd.f32 0.0, %v1521
        %v1523 = vpop.f32.mrf.mxu0
        %1524 = vdwg.mxu0
        %1525 = vrot.lane.b32.xlu0 %v796, 104
        %v1526 = vpop.permute.xlu0 %1525
        %v1528 = vsel %vm802, %v1526, 0
        %1530 = vmatprep.subr.bf16.mxu0 0
        %1531 = vmatpush1.bf16.xpose.msra.mxu0 0
        %1532 = vmatprep.subr.bf16.mxu0 0
        %1533 = vmatpush1.bf16.xpose.msra.mxu0 0
        %1534 = vmatprep.subr.bf16.mxu0 0
        %1535 = vmatpush1.bf16.xpose.msra.mxu0 0
        %1536 = vmatprep.subr.bf16.mxu0 0
        %1537 = vmatpush1.bf16.xpose.msra.mxu0 0
        %1538 = vmatprep.subr.bf16.mxu0 0
        %1539 = vmatpush1.bf16.xpose.msra.mxu0 0
        %1540 = vmatprep.subr.bf16.mxu0 0
        %1541 = vmatpush1.bf16.xpose.msra.mxu0 0
        %1542 = vmatprep.subr.bf16.mxu0 0
        %1543 = vmatpush1.bf16.xpose.msra.mxu0 0
        %1544 = vmatprep.subr.bf16.mxu0 0
        %1545 = vmatpush1.bf16.xpose.msra.mxu0 %v807
        %1546 = vmatprep.subr.bf16.mxu0 0
        %1547 = vmatpush2.bf16.xpose.msra.mxu0 0
        %1548 = vmatprep.subr.bf16.mxu0 0
        %1549 = vmatpush2.bf16.xpose.msra.mxu0 0
        %1550 = vmatprep.subr.bf16.mxu0 0
        %1551 = vmatpush2.bf16.xpose.msra.mxu0 0
        %1552 = vmatprep.subr.bf16.mxu0 0
        %1553 = vmatpush2.bf16.xpose.msra.mxu0 0
        %1554 = vmatprep.subr.bf16.mxu0 0
        %1555 = vmatpush2.bf16.xpose.msra.mxu0 0
        %1556 = vmatprep.subr.bf16.mxu0 0
        %1557 = vmatpush2.bf16.xpose.msra.mxu0 0
        %1558 = vmatprep.subr.bf16.mxu0 0
        %1559 = vmatpush2.bf16.xpose.msra.mxu0 0
        %1560 = vmatprep.subr.bf16.mxu0 0
        %1561 = vmatpush2.bf16.xpose.msra.mxu0 0
        %1562 = vmatprep.mubr.bf16.mxu0 0
        %1563 = vmatmul.mubr.bf16.gmra.mxu0 %v1528
        %v1564 = vpop.f32.mrf.mxu0
        %v1565 = vadd.f32 0.0, %v1564
        %v1566 = vpop.f32.mrf.mxu0
        %v1567 = vpop.f32.mrf.mxu0
        %v1568 = vadd.f32 0.0, %v1567
        %v1569 = vpop.f32.mrf.mxu0
        %1570 = vdwg.mxu0
        %1573 = vrot.lane.b32.xlu0 %v1565, 127
        %v1574 = vpop.permute.xlu0 %1573
        %1575 = vrot.lane.b32.xlu0 %v1568, 127
        %v1576 = vpop.permute.xlu0 %1575
        %1579 = vrot.lane.b32.xlu0 %v1565, 11
        %v1580 = vpop.permute.xlu0 %1579
        %1581 = vrot.lane.b32.xlu0 %v1568, 11
        %v1582 = vpop.permute.xlu0 %1581
        %v1585 = vsel %vm864, %v1574, %v1580
        %v1586 = vsel %vm864, %v1576, %v1582
        %v1587 = vsel %vm563, %v1585, %v1565
        %v1588 = vsel %vm564, %v1586, %v1568
        %1591 = vrot.lane.b32.xlu0 %v1587, 126
        %v1592 = vpop.permute.xlu0 %1591
        %1593 = vrot.lane.b32.xlu0 %v1588, 126
        %v1594 = vpop.permute.xlu0 %1593
        %1597 = vrot.lane.b32.xlu0 %v1587, 10
        %v1598 = vpop.permute.xlu0 %1597
        %1599 = vrot.lane.b32.xlu0 %v1588, 10
        %v1600 = vpop.permute.xlu0 %1599
        %v1603 = vsel %vm883, %v1592, %v1598
        %v1604 = vsel %vm883, %v1594, %v1600
        %v1605 = vsel %vm569, %v1603, %v1587
        %v1606 = vsel %vm570, %v1604, %v1588
        %1609 = vrot.lane.b32.xlu0 %v1605, 124
        %v1610 = vpop.permute.xlu0 %1609
        %1611 = vrot.lane.b32.xlu0 %v1606, 124
        %v1612 = vpop.permute.xlu0 %1611
        %1615 = vrot.lane.b32.xlu0 %v1605, 8
        %v1616 = vpop.permute.xlu0 %1615
        %1617 = vrot.lane.b32.xlu0 %v1606, 8
        %v1618 = vpop.permute.xlu0 %1617
        %v1621 = vsel %vm802, %v1610, %v1616
        %v1622 = vsel %vm802, %v1612, %v1618
        %v1623 = vsel %vm575, %v1621, %v1605
        %v1624 = vsel %vm576, %v1622, %v1606
        %1627 = vrot.lane.b32.xlu0 %v1623, 120
        %v1628 = vpop.permute.xlu0 %1627
        %1629 = vrot.lane.b32.xlu0 %v1624, 120
        %v1630 = vpop.permute.xlu0 %1629
        %1633 = vrot.lane.b32.xlu0 %v1623, 4
        %v1634 = vpop.permute.xlu0 %1633
        %1635 = vrot.lane.b32.xlu0 %v1624, 4
        %v1636 = vpop.permute.xlu0 %1635
        %v1639 = vsel %vm920, %v1628, %v1634
        %v1640 = vsel %vm920, %v1630, %v1636
        %v1641 = vsel %vm581, %v1639, %v1623
        %v1642 = vsel %vm582, %v1640, %v1624
        %1643 = vrot.lane.b32.xlu0 %v796, 72
        %v1644 = vpop.permute.xlu0 %1643
        %v1646 = vsel %vm802, %v1644, 0
        %1648 = vmatprep.subr.bf16.mxu0 0
        %1649 = vmatpush1.bf16.xpose.msra.mxu0 0
        %1650 = vmatprep.subr.bf16.mxu0 0
        %1651 = vmatpush1.bf16.xpose.msra.mxu0 0
        %1652 = vmatprep.subr.bf16.mxu0 0
        %1653 = vmatpush1.bf16.xpose.msra.mxu0 0
        %1654 = vmatprep.subr.bf16.mxu0 0
        %1655 = vmatpush1.bf16.xpose.msra.mxu0 0
        %1656 = vmatprep.subr.bf16.mxu0 0
        %1657 = vmatpush1.bf16.xpose.msra.mxu0 0
        %1658 = vmatprep.subr.bf16.mxu0 0
        %1659 = vmatpush1.bf16.xpose.msra.mxu0 0
        %1660 = vmatprep.subr.bf16.mxu0 0
        %1661 = vmatpush1.bf16.xpose.msra.mxu0 0
        %1662 = vmatprep.subr.bf16.mxu0 0
        %1663 = vmatpush1.bf16.xpose.msra.mxu0 %v1646
        %1664 = vmatprep.subr.bf16.mxu0 0
        %1665 = vmatpush2.bf16.xpose.msra.mxu0 0
        %1666 = vmatprep.subr.bf16.mxu0 0
        %1667 = vmatpush2.bf16.xpose.msra.mxu0 0
        %1668 = vmatprep.subr.bf16.mxu0 0
        %1669 = vmatpush2.bf16.xpose.msra.mxu0 0
        %1670 = vmatprep.subr.bf16.mxu0 0
        %1671 = vmatpush2.bf16.xpose.msra.mxu0 0
        %1672 = vmatprep.subr.bf16.mxu0 0
        %1673 = vmatpush2.bf16.xpose.msra.mxu0 0
        %1674 = vmatprep.subr.bf16.mxu0 0
        %1675 = vmatpush2.bf16.xpose.msra.mxu0 0
        %1676 = vmatprep.subr.bf16.mxu0 0
        %1677 = vmatpush2.bf16.xpose.msra.mxu0 0
        %1678 = vmatprep.subr.bf16.mxu0 0
        %1679 = vmatpush2.bf16.xpose.msra.mxu0 0
        %1680 = vmatprep.mubr.bf16.mxu0 0
        %1681 = vmatmul.mubr.bf16.gmra.mxu0 %v1528
        %v1682 = vpop.f32.mrf.mxu0
        %v1683 = vadd.f32 %v1641, %v1682
        %v1684 = vpop.f32.mrf.mxu0
        %v1685 = vpop.f32.mrf.mxu0
        %v1686 = vadd.f32 %v1642, %v1685
        %v1687 = vpop.f32.mrf.mxu0
        %1688 = vdwg.mxu0
        %v1689 = vadd.f32 %v1683, %v557
        %v1690 = vadd.f32 %v1686, %v558
        %v1691 = vsel %vm974, %v1689, -inf
        %1692 = vmax.xlane.f32.xlu0 %v1691
        %v1693 = vpop.xlane.xlu0 %1692
        %v1694 = vsel %vm978, %v1690, -inf
        %1695 = vmax.xlane.f32.xlu0 %v1694
        %v1696 = vpop.xlane.xlu0 %1695
        %v1697 = vsub.f32 %v1689, %v1693
        %v1698 = vsub.f32 %v1690, %v1696
        %v1699 = vmul.f32 %v1697, 1.442695
        %v1700 = vpow.pop %v1699
        %v1701 = vmul.f32 %v1698, 1.442695
        %v1702 = vpow.pop %v1701
        %v1703 = vsel %vm974, %v1700, 0.0
        %1704 = vadd.xlane.f32.xlu0 %v1703
        %v1705 = vpop.xlane.xlu0 %1704
        %v1706 = vsel %vm978, %v1702, 0.0
        %1707 = vadd.xlane.f32.xlu0 %v1706
        %v1708 = vpop.xlane.xlu0 %1707
        %v1709 = vrcp.pop %v1705
        %v1710 = vrcp.pop %v1708
        %v1711 = vmul.f32 %v1700, %v1709
        %v1712 = vmul.f32 %v1702, %v1710
        %v1713 = vpack.c.bf16 %v1712, %v1711
        %1714 = vrot.lane.b32.xlu0 %v796, 40
        %v1715 = vpop.permute.xlu0 %1714
        %v1717 = vsel %vm974, %v1713, 0
        %v1720 = vsel %vm1004, %v1715, 0
        %1722 = vmatprep.subr.bf16.mxu0 0
        %1723 = vmatpush1.bf16.msra.mxu0 0
        %1724 = vmatprep.subr.bf16.mxu0 0
        %1725 = vmatpush1.bf16.msra.mxu0 0
        %1726 = vmatprep.subr.bf16.mxu0 0
        %1727 = vmatpush1.bf16.msra.mxu0 0
        %1728 = vmatprep.subr.bf16.mxu0 0
        %1729 = vmatpush1.bf16.msra.mxu0 0
        %1730 = vmatprep.subr.bf16.mxu0 0
        %1731 = vmatpush1.bf16.msra.mxu0 0
        %1732 = vmatprep.subr.bf16.mxu0 0
        %1733 = vmatpush1.bf16.msra.mxu0 0
        %1734 = vmatprep.subr.bf16.mxu0 0
        %1735 = vmatpush1.bf16.msra.mxu0 0
        %1736 = vmatprep.subr.bf16.mxu0 0
        %1737 = vmatpush1.bf16.msra.mxu0 %v1720
        %1738 = vmatprep.subr.bf16.mxu0 0
        %1739 = vmatpush2.bf16.msra.mxu0 0
        %1740 = vmatprep.subr.bf16.mxu0 0
        %1741 = vmatpush2.bf16.msra.mxu0 0
        %1742 = vmatprep.subr.bf16.mxu0 0
        %1743 = vmatpush2.bf16.msra.mxu0 0
        %1744 = vmatprep.subr.bf16.mxu0 0
        %1745 = vmatpush2.bf16.msra.mxu0 0
        %1746 = vmatprep.subr.bf16.mxu0 0
        %1747 = vmatpush2.bf16.msra.mxu0 0
        %1748 = vmatprep.subr.bf16.mxu0 0
        %1749 = vmatpush2.bf16.msra.mxu0 0
        %1750 = vmatprep.subr.bf16.mxu0 0
        %1751 = vmatpush2.bf16.msra.mxu0 0
        %1752 = vmatprep.subr.bf16.mxu0 0
        %1753 = vmatpush2.bf16.msra.mxu0 0
        %1754 = vmatprep.mubr.bf16.mxu0 0
        %1755 = vmatmul.mubr.bf16.gmra.mxu0 %v1717
        %v1756 = vpop.f32.mrf.mxu0
        %v1757 = vadd.f32 0.0, %v1756
        %v1758 = vpop.f32.mrf.mxu0
        %v1759 = vpop.f32.mrf.mxu0
        %v1760 = vadd.f32 0.0, %v1759
        %v1761 = vpop.f32.mrf.mxu0
        %1762 = vdwg.mxu0
        %1765 = vrot.lane.b32.xlu0 %v1281, 8
        %v1766 = vpop.permute.xlu0 %1765
        %1767 = vrot.lane.b32.xlu0 %v1284, 8
        %v1768 = vpop.permute.xlu0 %1767
        %1773 = vrot.lane.b32.xlu0 %v1519, 16
        %v1774 = vpop.permute.xlu0 %1773
        %1775 = vrot.lane.b32.xlu0 %v1522, 16
        %v1776 = vpop.permute.xlu0 %1775
        %1781 = vrot.lane.b32.xlu0 %v1757, 24
        %v1782 = vpop.permute.xlu0 %1781
        %1783 = vrot.lane.b32.xlu0 %v1760, 24
        %v1784 = vpop.permute.xlu0 %1783
        %v1787 = vsel %vm802, %v1043, %v1766
        %v1788 = vsel %vm802, %v1046, %v1768
        %vm1789 = vcmask 130048
        %v1790 = vsel %vm1789, %v1787, %v1774
        %v1791 = vsel %vm1789, %v1788, %v1776
        %vm1792 = vcmask 195584
        %v1793 = vsel %vm1792, %v1790, %v1782
        %v1794 = vsel %vm1792, %v1791, %v1784
        %v1795 = vpack.c.bf16 %v1794, %v1793
        %s1796 = smul.addr %s720, 4
        %s1797 = scalar_lea.vmem %s7, %s1796
        %v1798 = vld [vmem:[%s1797] sm:$0xf]
        %v1799 = vld [vmem:[%s1797 + $0x4] sm:$0xf]
        %v1800 = vld [vmem:[%s1797 + $0x8] sm:$0xf]
        %v1801 = vld [vmem:[%s1797 + $0xc] sm:$0xf]
        %v1806 = vunpack.c.l.b16 %v1798
        %v1807 = vunpack.c.l.b16 %v1799
        %v1808 = vunpack.c.l.b16 %v1800
        %v1809 = vunpack.c.l.b16 %v1801
        %v1810 = vpack.c.b16 %v1807, %v1806
        %v1811 = vpack.c.b16 %v1809, %v1808
        %v1815 = vsel %vm674, %v1795, 0
        %1817 = vmatprep.subr.bf16.mxu0 0
        %1818 = vmatpush1.bf16.msra.mxu0 0
        %1819 = vmatprep.subr.bf16.mxu0 0
        %1820 = vmatpush1.bf16.msra.mxu0 0
        %1821 = vmatprep.subr.bf16.mxu0 0
        %1822 = vmatpush1.bf16.msra.mxu0 0
        %1823 = vmatprep.subr.bf16.mxu0 0
        %1824 = vmatpush1.bf16.msra.mxu0 0
        %1825 = vmatprep.subr.bf16.mxu0 0
        %1826 = vmatpush1.bf16.msra.mxu0 0
        %1827 = vmatprep.subr.bf16.mxu0 0
        %1828 = vmatpush1.bf16.msra.mxu0 0
        %1829 = vmatprep.subr.bf16.mxu0 0
        %1830 = vmatpush1.bf16.msra.mxu0 %v1811
        %1831 = vmatprep.subr.bf16.mxu0 0
        %1832 = vmatpush1.bf16.msra.mxu0 %v1810
        %1833 = vmatprep.subr.bf16.mxu0 0
        %1834 = vmatpush2.bf16.msra.mxu0 0
        %1835 = vmatprep.subr.bf16.mxu0 0
        %1836 = vmatpush2.bf16.msra.mxu0 0
        %1837 = vmatprep.subr.bf16.mxu0 0
        %1838 = vmatpush2.bf16.msra.mxu0 0
        %1839 = vmatprep.subr.bf16.mxu0 0
        %1840 = vmatpush2.bf16.msra.mxu0 0
        %1841 = vmatprep.subr.bf16.mxu0 0
        %1842 = vmatpush2.bf16.msra.mxu0 0
        %1843 = vmatprep.subr.bf16.mxu0 0
        %1844 = vmatpush2.bf16.msra.mxu0 0
        %1845 = vmatprep.subr.bf16.mxu0 0
        %1846 = vmatpush2.bf16.msra.mxu0 0
        %1847 = vmatprep.subr.bf16.mxu0 0
        %1848 = vmatpush2.bf16.msra.mxu0 0
        %1849 = vmatprep.mubr.bf16.mxu0 0
        %1850 = vmatmul.mubr.bf16.gmra.mxu0 %v1815
        %v1851 = vpop.f32.mrf.mxu0
        %v1852 = vadd.f32 0.0, %v1851
        %v1853 = vpop.f32.mrf.mxu0
        %v1854 = vpop.f32.mrf.mxu0
        %v1855 = vadd.f32 0.0, %v1854
        %v1856 = vpop.f32.mrf.mxu0
        %1857 = vdwg.mxu0
        %v1858 = vadd.f32 %v668, %v1852
        %v1859 = vadd.f32 %v669, %v1855
        %s1860 = scalar_lea.vmem %s8, %s663
        %v1861 = vld [vmem:[%s1860] sm:$0x1]
        %v1863 = vlaneseq
        %v1864 = vshrl.u32 %v1863, 7
        %v1865 = vsub.s32 0, %v1864
        %v1866 = vrot.slane %v1861, %v1865
        %v1868 = vadd.f32 %v1858, %v1866
        %v1869 = vadd.f32 %v1859, %v1866
        %s1870 = scalar_lea.vmem %s9, %s663
        %v1871 = vld [vmem:[%s1870] sm:$0x1]
        %s1872 = scalar_lea.vmem %s10, %s663
        %v1873 = vld [vmem:[%s1872] sm:$0x1]
        %v1874 = vsel %vm674, %v1868, 0.0
        %1875 = vadd.xlane.f32.xlu0 %v1874
        %v1876 = vpop.xlane.xlu0 %1875
        %v1877 = vsel %vm678, %v1869, 0.0
        %1878 = vadd.xlane.f32.xlu0 %v1877
        %v1879 = vpop.xlane.xlu0 %1878
        %v1880 = vmul.f32 %v1876, %v682
        %v1881 = vmul.f32 %v1879, %v682
        %v1882 = vsub.f32 %v1868, %v1880
        %v1883 = vsub.f32 %v1869, %v1881
        %v1884 = vmul.f32 %v1882, %v1882
        %v1885 = vmul.f32 %v1883, %v1883
        %v1886 = vsel %vm674, %v1884, 0.0
        %1887 = vadd.xlane.f32.xlu0 %v1886
        %v1888 = vpop.xlane.xlu0 %1887
        %v1889 = vsel %vm678, %v1885, 0.0
        %1890 = vadd.xlane.f32.xlu0 %v1889
        %v1891 = vpop.xlane.xlu0 %1890
        %v1892 = vmul.f32 %v1888, %v682
        %v1893 = vmul.f32 %v1891, %v682
        %v1894 = vadd.f32 %v1892, 1e-05
        %v1895 = vadd.f32 %v1893, 1e-05
        %v1896 = vrsqrt.pop %v1894
        %v1897 = vrsqrt.pop %v1895
        %v1898 = vmul.f32 %v1882, %v1896
        %v1899 = vmul.f32 %v1883, %v1897
        %v1901 = vlaneseq
        %v1902 = vshrl.u32 %v1901, 7
        %v1903 = vsub.s32 0, %v1902
        %v1904 = vrot.slane %v1871, %v1903
        %v1906 = vmul.f32 %v1898, %v1904
        %v1907 = vmul.f32 %v1899, %v1904
        %v1909 = vlaneseq
        %v1910 = vshrl.u32 %v1909, 7
        %v1911 = vsub.s32 0, %v1910
        %v1912 = vrot.slane %v1873, %v1911
        %v1914 = vadd.f32 %v1906, %v1912
        %v1915 = vadd.f32 %v1907, %v1912
        %v1916 = vpack.c.bf16 %v1915, %v1914
        %s1917 = smul.addr %s720, 4
        %s1918 = scalar_lea.vmem %s11, %s1917
        %v1919 = vld [vmem:[%s1918] sm:$0xf]
        %v1920 = vld [vmem:[%s1918 + $0x4] sm:$0xf]
        %v1921 = vld [vmem:[%s1918 + $0x8] sm:$0xf]
        %v1922 = vld [vmem:[%s1918 + $0xc] sm:$0xf]
        %s1923 = scalar_lea.vmem %s12, %s663
        %v1924 = vld [vmem:[%s1923] sm:$0x1]
        %v1926 = vlaneseq
        %v1927 = vshrl.u32 %v1926, 7
        %v1928 = vsub.s32 0, %v1927
        %v1929 = vrot.slane %v1924, %v1928
        %v1935 = vunpack.c.l.b16 %v1919
        %v1936 = vunpack.c.l.b16 %v1920
        %v1937 = vunpack.c.l.b16 %v1921
        %v1938 = vunpack.c.l.b16 %v1922
        %v1939 = vpack.c.b16 %v1936, %v1935
        %v1940 = vpack.c.b16 %v1938, %v1937
        %v1944 = vsel %vm674, %v1916, 0
        %1946 = vmatprep.subr.bf16.mxu0 0
        %1947 = vmatpush1.bf16.msra.mxu0 0
        %1948 = vmatprep.subr.bf16.mxu0 0
        %1949 = vmatpush1.bf16.msra.mxu0 0
        %1950 = vmatprep.subr.bf16.mxu0 0
        %1951 = vmatpush1.bf16.msra.mxu0 0
        %1952 = vmatprep.subr.bf16.mxu0 0
        %1953 = vmatpush1.bf16.msra.mxu0 0
        %1954 = vmatprep.subr.bf16.mxu0 0
        %1955 = vmatpush1.bf16.msra.mxu0 0
        %1956 = vmatprep.subr.bf16.mxu0 0
        %1957 = vmatpush1.bf16.msra.mxu0 0
        %1958 = vmatprep.subr.bf16.mxu0 0
        %1959 = vmatpush1.bf16.msra.mxu0 %v1940
        %1960 = vmatprep.subr.bf16.mxu0 0
        %1961 = vmatpush1.bf16.msra.mxu0 %v1939
        %1962 = vmatprep.subr.bf16.mxu0 0
        %1963 = vmatpush2.bf16.msra.mxu0 0
        %1964 = vmatprep.subr.bf16.mxu0 0
        %1965 = vmatpush2.bf16.msra.mxu0 0
        %1966 = vmatprep.subr.bf16.mxu0 0
        %1967 = vmatpush2.bf16.msra.mxu0 0
        %1968 = vmatprep.subr.bf16.mxu0 0
        %1969 = vmatpush2.bf16.msra.mxu0 0
        %1970 = vmatprep.subr.bf16.mxu0 0
        %1971 = vmatpush2.bf16.msra.mxu0 0
        %1972 = vmatprep.subr.bf16.mxu0 0
        %1973 = vmatpush2.bf16.msra.mxu0 0
        %1974 = vmatprep.subr.bf16.mxu0 0
        %1975 = vmatpush2.bf16.msra.mxu0 0
        %1976 = vmatprep.subr.bf16.mxu0 0
        %1977 = vmatpush2.bf16.msra.mxu0 0
        %1978 = vmatprep.mubr.bf16.mxu0 0
        %1979 = vmatmul.mubr.bf16.gmra.mxu0 %v1944
        %v1980 = vpop.f32.mrf.mxu0
        %v1981 = vadd.f32 %v1929, %v1980
        %v1982 = vpop.f32.mrf.mxu0
        %v1983 = vpop.f32.mrf.mxu0
        %v1984 = vadd.f32 %v1929, %v1983
        %v1985 = vpop.f32.mrf.mxu0
        %1986 = vdwg.mxu0
        %v1987 = vmul.f32 %v1981, %v1981
        %v1988 = vmul.f32 %v1984, %v1984
        %v1989 = vmul.f32 %v1981, %v1987
        %v1990 = vmul.f32 %v1984, %v1988
        %v1991 = vmul.f32 %v1989, 0.044715
        %v1992 = vmul.f32 %v1990, 0.044715
        %v1993 = vadd.f32 %v1981, %v1991
        %v1994 = vadd.f32 %v1984, %v1992
        %v1995 = vmul.f32 %v1993, 0.7978846
        %v1996 = vmul.f32 %v1994, 0.7978846
        %v1997 = vtanh.pop %v1995
        %v1998 = vtanh.pop %v1996
        %v1999 = vadd.f32 %v1997, 1.0
        %v2000 = vadd.f32 %v1998, 1.0
        %v2001 = vmul.f32 %v1999, 0.5
        %v2002 = vmul.f32 %v2000, 0.5
        %v2003 = vmul.f32 %v1981, %v2001
        %v2004 = vmul.f32 %v1984, %v2002
        %v2005 = vpack.c.bf16 %v2004, %v2003
        %s2006 = smul.u32 %s663, 16
        %s2007 = smul.addr %s2006, 4
        %s2008 = scalar_lea.vmem %s13, %s2007
        %v2009 = vld [vmem:[%s2008] sm:$0xf]
        %v2010 = vld [vmem:[%s2008 + $0x4] sm:$0xf]
        %v2011 = vld [vmem:[%s2008 + $0x8] sm:$0xf]
        %v2012 = vld [vmem:[%s2008 + $0xc] sm:$0xf]
        %v2013 = vld [vmem:[%s2008 + $0x10] sm:$0xf]
        %v2014 = vld [vmem:[%s2008 + $0x14] sm:$0xf]
        %v2015 = vld [vmem:[%s2008 + $0x18] sm:$0xf]
        %v2016 = vld [vmem:[%s2008 + $0x1c] sm:$0xf]
        %v2017 = vld [vmem:[%s2008 + $0x20] sm:$0xf]
        %v2018 = vld [vmem:[%s2008 + $0x24] sm:$0xf]
        %v2019 = vld [vmem:[%s2008 + $0x28] sm:$0xf]
        %v2020 = vld [vmem:[%s2008 + $0x2c] sm:$0xf]
        %v2021 = vld [vmem:[%s2008 + $0x30] sm:$0xf]
        %v2022 = vld [vmem:[%s2008 + $0x34] sm:$0xf]
        %v2023 = vld [vmem:[%s2008 + $0x38] sm:$0xf]
        %v2024 = vld [vmem:[%s2008 + $0x3c] sm:$0xf]
        %v2041 = vunpack.c.l.b16 %v2009
        %v2042 = vunpack.c.l.b16 %v2010
        %v2043 = vunpack.c.l.b16 %v2011
        %v2044 = vunpack.c.l.b16 %v2012
        %v2045 = vunpack.c.l.b16 %v2013
        %v2046 = vunpack.c.l.b16 %v2014
        %v2047 = vunpack.c.l.b16 %v2015
        %v2048 = vunpack.c.l.b16 %v2016
        %v2049 = vunpack.c.l.b16 %v2017
        %v2050 = vunpack.c.l.b16 %v2018
        %v2051 = vunpack.c.l.b16 %v2019
        %v2052 = vunpack.c.l.b16 %v2020
        %v2053 = vunpack.c.l.b16 %v2021
        %v2054 = vunpack.c.l.b16 %v2022
        %v2055 = vunpack.c.l.b16 %v2023
        %v2056 = vunpack.c.l.b16 %v2024
        %v2057 = vpack.c.b16 %v2042, %v2041
        %v2058 = vpack.c.b16 %v2044, %v2043
        %v2059 = vpack.c.b16 %v2046, %v2045
        %v2060 = vpack.c.b16 %v2048, %v2047
        %v2061 = vpack.c.b16 %v2050, %v2049
        %v2062 = vpack.c.b16 %v2052, %v2051
        %v2063 = vpack.c.b16 %v2054, %v2053
        %v2064 = vpack.c.b16 %v2056, %v2055
        %2073 = vmatprep.subr.bf16.mxu0 0
        %2074 = vmatpush1.bf16.msra.mxu0 %v2064
        %2075 = vmatprep.subr.bf16.mxu0 0
        %2076 = vmatpush1.bf16.msra.mxu0 %v2063
        %2077 = vmatprep.subr.bf16.mxu0 0
        %2078 = vmatpush1.bf16.msra.mxu0 %v2062
        %2079 = vmatprep.subr.bf16.mxu0 0
        %2080 = vmatpush1.bf16.msra.mxu0 %v2061
        %2081 = vmatprep.subr.bf16.mxu0 0
        %2082 = vmatpush1.bf16.msra.mxu0 %v2060
        %2083 = vmatprep.subr.bf16.mxu0 0
        %2084 = vmatpush1.bf16.msra.mxu0 %v2059
        %2085 = vmatprep.subr.bf16.mxu0 0
        %2086 = vmatpush1.bf16.msra.mxu0 %v2058
        %2087 = vmatprep.subr.bf16.mxu0 0
        %2088 = vmatpush1.bf16.msra.mxu0 %v2057
        %2089 = vmatprep.subr.bf16.mxu0 0
        %2090 = vmatpush2.bf16.msra.mxu0 0
        %2091 = vmatprep.subr.bf16.mxu0 0
        %2092 = vmatpush2.bf16.msra.mxu0 0
        %2093 = vmatprep.subr.bf16.mxu0 0
        %2094 = vmatpush2.bf16.msra.mxu0 0
        %2095 = vmatprep.subr.bf16.mxu0 0
        %2096 = vmatpush2.bf16.msra.mxu0 0
        %2097 = vmatprep.subr.bf16.mxu0 0
        %2098 = vmatpush2.bf16.msra.mxu0 0
        %2099 = vmatprep.subr.bf16.mxu0 0
        %2100 = vmatpush2.bf16.msra.mxu0 0
        %2101 = vmatprep.subr.bf16.mxu0 0
        %2102 = vmatpush2.bf16.msra.mxu0 0
        %2103 = vmatprep.subr.bf16.mxu0 0
        %2104 = vmatpush2.bf16.msra.mxu0 0
        %2105 = vmatprep.mubr.bf16.mxu0 0
        %2106 = vmatmul.mubr.bf16.gmra.mxu0 %v2005
        %v2107 = vpop.f32.mrf.mxu0
        %v2108 = vadd.f32 0.0, %v2107
        %v2109 = vpop.f32.mrf.mxu0
        %v2110 = vpop.f32.mrf.mxu0
        %v2111 = vadd.f32 0.0, %v2110
        %v2112 = vpop.f32.mrf.mxu0
        %2113 = vdwg.mxu0
        %v2114 = vadd.f32 %v1868, %v2108
        %v2115 = vadd.f32 %v1869, %v2111
        %s2116 = scalar_lea.vmem %s14, %s663
        %v2117 = vld [vmem:[%s2116] sm:$0x1]
        %v2119 = vlaneseq
        %v2120 = vshrl.u32 %v2119, 7
        %v2121 = vsub.s32 0, %v2120
        %v2122 = vrot.slane %v2117, %v2121
        %v2124 = vadd.f32 %v2114, %v2122
        %v2125 = vadd.f32 %v2115, %v2122
      $region93: #{_lambda_.1} parent=87 // loop_footer
        %s667 = sadd.s32 1, %s663
      $region94: #{_lambda_.1} parent=87 // loop_footer_branch
        %662 = sbr.rel target = $region90
      $region95: #{_lambda_.1} parent=87 // loop_exit
        _
      %v2126 = vpack.c.bf16 %v669, %v668
      %v2127 = vld [vmem:[%s15] sm:$0xf]
      %v2128 = vld [vmem:[%s15 + $0x4] sm:$0xf]
      %v2129 = vld [vmem:[%s15 + $0x8] sm:$0xf]
      %v2130 = vld [vmem:[%s15 + $0xc] sm:$0xf]
      %v2131 = vld [vmem:[%s16] sm:$0x1]
      %v2133 = vlaneseq
      %v2134 = vshrl.u32 %v2133, 7
      %v2135 = vsub.s32 0, %v2134
      %v2136 = vrot.slane %v2131, %v2135
      %v2142 = vunpack.c.l.b16 %v2127
      %v2143 = vunpack.c.l.b16 %v2128
      %v2144 = vunpack.c.l.b16 %v2129
      %v2145 = vunpack.c.l.b16 %v2130
      %v2146 = vpack.c.b16 %v2143, %v2142
      %v2147 = vpack.c.b16 %v2145, %v2144
      %vm2150 = vcmask 261120
      %v2152 = vsel %vm2150, %v2126, 0
      %2154 = vmatprep.subr.bf16.mxu0 0
      %2155 = vmatpush1.bf16.msra.mxu0 0
      %2156 = vmatprep.subr.bf16.mxu0 0
      %2157 = vmatpush1.bf16.msra.mxu0 0
      %2158 = vmatprep.subr.bf16.mxu0 0
      %2159 = vmatpush1.bf16.msra.mxu0 0
      %2160 = vmatprep.subr.bf16.mxu0 0
      %2161 = vmatpush1.bf16.msra.mxu0 0
      %2162 = vmatprep.subr.bf16.mxu0 0
      %2163 = vmatpush1.bf16.msra.mxu0 0
      %2164 = vmatprep.subr.bf16.mxu0 0
      %2165 = vmatpush1.bf16.msra.mxu0 0
      %2166 = vmatprep.subr.bf16.mxu0 0
      %2167 = vmatpush1.bf16.msra.mxu0 %v2147
      %2168 = vmatprep.subr.bf16.mxu0 0
      %2169 = vmatpush1.bf16.msra.mxu0 %v2146
      %2170 = vmatprep.subr.bf16.mxu0 0
      %2171 = vmatpush2.bf16.msra.mxu0 0
      %2172 = vmatprep.subr.bf16.mxu0 0
      %2173 = vmatpush2.bf16.msra.mxu0 0
      %2174 = vmatprep.subr.bf16.mxu0 0
      %2175 = vmatpush2.bf16.msra.mxu0 0
      %2176 = vmatprep.subr.bf16.mxu0 0
      %2177 = vmatpush2.bf16.msra.mxu0 0
      %2178 = vmatprep.subr.bf16.mxu0 0
      %2179 = vmatpush2.bf16.msra.mxu0 0
      %2180 = vmatprep.subr.bf16.mxu0 0
      %2181 = vmatpush2.bf16.msra.mxu0 0
      %2182 = vmatprep.subr.bf16.mxu0 0
      %2183 = vmatpush2.bf16.msra.mxu0 0
      %2184 = vmatprep.subr.bf16.mxu0 0
      %2185 = vmatpush2.bf16.msra.mxu0 0
      %2186 = vmatprep.mubr.bf16.mxu0 0
      %2187 = vmatmul.mubr.bf16.gmra.mxu0 %v2152
      %v2188 = vpop.f32.mrf.mxu0
      %v2189 = vadd.f32 %v2136, %v2188
      %v2190 = vpop.f32.mrf.mxu0
      %v2191 = vpop.f32.mrf.mxu0
      %v2192 = vadd.f32 %v2136, %v2191
      %v2193 = vpop.f32.mrf.mxu0
      %2194 = vdwg.mxu0
      %2195 = vst [vmem:[%s548] sm:$0xff] %v2189
      %2196 = vst [vmem:[%s548 + $0x8] sm:$0xf] %v2192
      %p2197 = scmp.lt.s32.totalorder %s28, 1
      %s2198 = scalar_select %p2197, %s28, 1
      %s2199 = smul.addr %s2198, 2
      %s2200 = smul.addr %s2199, 8
      %s2201 = scalar_lea.vmem %s17, %s2200
      // Predicated region
      $region96: #{_lambda_.1} parent=87 // pred_check
        %p2202 = pneg %p408
      $region97: #{_lambda_.1} parent=87 // pred_check_branch
        %2204 = sbr.rel (%p2202) target = $region99
      $region98: #{_lambda_.1} parent=87 // pred_region
        _
      $region99: #{_lambda_.1} parent=87 // pred_fallthru
        _
    $region88: #{_lambda_.1} parent=5 // pred_fallthru
      _
    %p2205 = scmp.le.s32.totalorder 2, %s23
    // Predicated region
    $region100: #{_lambda_.1} parent=5 // pred_check
      %p2206 = pneg %p2205
    $region101: #{_lambda_.1} parent=5 // pred_check_branch
      %2208 = sbr.rel (%p2206) target = $region103
    $region102: #{_lambda_.1} parent=5 // pred_region
      %s2209 = ssub.s32 %s23, 2
      // Predicated region
      $region104: #{_lambda_.1} parent=102 // pred_check
        %p2210 = pneg %p414
      $region105: #{_lambda_.1} parent=102 // pred_check_branch
        %2212 = sbr.rel (%p2210) target = $region107
      $region106: #{_lambda_.1} parent=102 // pred_region
        %p2213 = scmp.lt.s32.totalorder %s29, 1
        %s2214 = scalar_select %p2213, %s29, 1
        %s2215 = smul.addr %s2214, 2
        %s2216 = smul.addr %s2215, 8
        %s2217 = scalar_lea.vmem %s17, %s2216
      $region107: #{_lambda_.1} parent=102 // pred_fallthru
        _
    $region103: #{_lambda_.1} parent=5 // pred_fallthru
      _
  $region6: #{_lambda_.1} parent=0 // loop_footer
    %s27 = sadd.s32 1, %s23
  $region7: #{_lambda_.1} parent=0 // loop_footer_branch
    %22 = sbr.rel target = $region3
  $region8: #{_lambda_.1} parent=0 // loop_exit
    _

</llo_original>
